<compile_context>
chip_gen: v7x
topology: tpu7x:2x2x1
jax: 0.10.0
libtpu: 0.0.40
codegen_flags: <defaults>
</compile_context>

<pallas_src>
import functools
import math

import jax
import jax.numpy as jnp
from jax.experimental import pallas as pl
from jax.experimental.pallas import tpu as pltpu


def _round_up(x, m):
    return (x + m - 1) // m * m


def _cdiv(a, b):
    return (a + b - 1) // b


def _device_info():
    """Returns (is_v5e, has_two_tensorcores, vmem_capacity_bytes), with fallbacks."""
    kind = ""
    try:
        kind = (jax.devices()[0].device_kind or "").lower()
    except Exception:
        pass
    vmem = None
    try:
        vmem = int(pltpu.get_tpu_info().vmem_capacity_bytes)
    except Exception:
        vmem = None
    is_v7 = "7" in kind
    if vmem is None:
        vmem = (64 << 20) if is_v7 else (128 << 20)
    is_v5e = ("v5 lite" in kind) or ("v5e" in kind) or ("v5litepod" in kind)
    return is_v5e, is_v7, vmem


# ---------------------------------------------------------------------------
# Fused kernel: all iterations for one batch tile, weight resident in VMEM.
#   x_ref:     (tm, Fp_in)   f32, block-0 input columns (zero padded)
#   wt_ref:    (Dp, Dp)      compute dtype, full W_big^T (resident)
#   wlast_ref: (Dp, Fp_out)  compute dtype, columns of the last output block
#   bias_ref:  (8, Dp)       f32: row0 = first-iter bias, row1 = all-iter bias,
#                            row2 = last-block first-iter bias, row3 = last-block bias
#   o_ref:     (tm, Fp_out)  f32
#   act_ref:   (tm, Dp)      f32 scratch (loop-carried activation)
# ---------------------------------------------------------------------------
def _fused_iter_kernel(x_ref, wt_ref, wlast_ref, bias_ref, o_ref, act_ref, *,
                       num_iterations, fp_in, fp_out, unroll):
    T = num_iterations
    cdt = wlast_ref.dtype
    x0 = x_ref[...].astype(cdt)                                  # (tm, fp_in)

    if T == 1:
        # Single iteration: restricted input columns AND restricted output block.
        y = jnp.dot(x0, wlast_ref[:fp_in, :],
                    preferred_element_type=jnp.float32) + bias_ref[2:3, :fp_out]
        o_ref[...] = jnp.maximum(y, 0.0).astype(o_ref.dtype)
        return

    # Iteration 0: only the first fp_in input columns can be non-zero.
    y = jnp.dot(x0, wt_ref[:fp_in, :],
                preferred_element_type=jnp.float32) + bias_ref[0:1, :]
    act_ref[...] = jnp.maximum(y, 0.0)

    # Iterations 1 .. T-2: full-width update, activation kept in VMEM scratch.
    if T > 2:
        @pl.loop(1, T - 1, unroll=unroll)
        def _(_):
            xx = act_ref[...].astype(cdt)
            yy = jnp.dot(xx, wt_ref[...],
                         preferred_element_type=jnp.float32) + bias_ref[1:2, :]
            act_ref[...] = jnp.maximum(yy, 0.0)

    # Final iteration: only the last block's outputs are returned by the module.
    yl = jnp.dot(act_ref[...].astype(cdt), wlast_ref[...],
                 preferred_element_type=jnp.float32) + bias_ref[3:4, :fp_out]
    o_ref[...] = jnp.maximum(yl, 0.0).astype(o_ref.dtype)


# ---------------------------------------------------------------------------
# Fallback: K/N-tiled  relu(X @ Wt + b)  with an f32 accumulator scratch.
# Used (per iteration) when the resident-weight path does not fit VMEM.
# ---------------------------------------------------------------------------
def _tiled_step_kernel(x_ref, wt_ref, b_ref, o_ref, acc_ref):
    k = pl.program_id(2)

    @pl.when(k == 0)
    def _():
        acc_ref[...] = jnp.zeros_like(acc_ref)

    acc_ref[...] += jnp.dot(x_ref[...].astype(wt_ref.dtype), wt_ref[...],
                            preferred_element_type=jnp.float32)

    @pl.when(k == pl.num_programs(2) - 1)
    def _():
        o_ref[...] = jnp.maximum(acc_ref[...] + b_ref[0:1, :], 0.0).astype(o_ref.dtype)


def _tiled_linear_relu(x, wt, bias_tile, *, tm, vmem_cap):
    M, K = x.shape
    K2, N = wt.shape
    assert K == K2
    tk = math.gcd(K, 512)
    tn = math.gcd(N, 512)
    itemsize = jnp.dtype(wt.dtype).itemsize
    est = (2 * tm * tk * 4 + 2 * tk * tn * itemsize + 2 * tm * tn * 4
           + tm * tn * 4 + 2 * 8 * tn * 4)
    vlim = min(int(0.9 * vmem_cap), max(32 << 20, int(est * 1.5)))
    return pl.pallas_call(
        _tiled_step_kernel,
        out_shape=jax.ShapeDtypeStruct((M, N), jnp.float32),
        grid_spec=pltpu.PrefetchScalarGridSpec(
            num_scalar_prefetch=0,
            grid=(M // tm, N // tn, K // tk),
            in_specs=[
                pl.BlockSpec((tm, tk), lambda i, j, k: (i, k)),
                pl.BlockSpec((tk, tn), lambda i, j, k: (k, j)),
                pl.BlockSpec((8, tn), lambda i, j, k: (0, j)),
            ],
            out_specs=pl.BlockSpec((tm, tn), lambda i, j, k: (i, j)),
            scratch_shapes=[pltpu.VMEM((tm, tn), jnp.float32)],
        ),
        compiler_params=pltpu.CompilerParams(
            dimension_semantics=("parallel", "parallel", "arbitrary"),
            vmem_limit_bytes=vlim),
    )(x, wt, bias_tile)


def _bias_tile(b, n):
    return jnp.zeros((8, n), jnp.float32).at[0].set(b)


# ---------------------------------------------------------------------------
# Wrapper
# ---------------------------------------------------------------------------
def iterative_sequential2d(x0, W_blocks, b_blocks, num_iterations, *,
                           compute_dtype=jnp.bfloat16, force_fallback=False):
    """
    x0:        (B, F)        single real input (block 0)
    W_blocks:  (n, n, F, F)  W_blocks[i, j] maps input j -> output i (torch (out, in))
    b_blocks:  (n, n, F)
    returns:   (B, F)        X[-1] after num_iterations of X <- relu(Sequential2D(X))

    compute_dtype=bfloat16 by default (MXU-native; f32 accumulation). Activations
    are downcast to bf16 before each dot, so results drift slightly from an f32
    reference; pass compute_dtype=jnp.float32 for bit-tight accuracy.
    """
    # TODO(synk): only ReLU activation and a fully dense n x n block grid are
    # supported; arbitrary activation callables / None interior blocks would need
    # a block-sparse variant.
    T = int(num_iterations)
    assert T >= 1
    n, n2, F, F2 = W_blocks.shape
    assert n == n2 and F == F2
    B = x0.shape[0]
    D = n * F
    out_dtype = x0.dtype
    cdt = jnp.dtype(compute_dtype)
    assert cdt in (jnp.dtype(jnp.float32), jnp.dtype(jnp.bfloat16))

    is_v5e, two_cores, vmem_cap = _device_info()

    # ---- big block matrices --------------------------------------------------
    # W_big[i*F:(i+1)*F, j*F:(j+1)*F] = W_blocks[i, j];  y = Xc @ W_big.T + bias
    W_big = jnp.transpose(W_blocks, (0, 2, 1, 3)).reshape(D, D)
    Wt_full = W_big.T                                            # (D_in, D_out)

    bias_first = b_blocks[:, 0, :].reshape(D)          # iter 0: only input block 0 live
    bias_all = jnp.sum(b_blocks, axis=1).reshape(D)    # iters >= 1: all inputs live

    # ---- TPU-friendly padding ------------------------------------------------
    Dp = _round_up(D, 128)
    Fp_in = _round_up(F, 128)        # block-0 input columns (lane aligned)
    Fp_out = _round_up(F, 128)       # last-block output columns (lane aligned)
    sub = 8

    # Near-equal, aligned batch tiles; >=2 tiles on 2-TensorCore chips when B allows.
    max_tile = 128 if is_v5e else 256
    num_tiles = _cdiv(B, max_tile)
    if two_cores:
        num_tiles = max(num_tiles, min(2, _cdiv(B, sub)))
    tm = _round_up(_cdiv(B, num_tiles), sub)
    num_tiles = _cdiv(B, tm)
    Bp = num_tiles * tm

    Wt = jnp.pad(Wt_full, ((0, Dp - D), (0, Dp - D))).astype(cdt)
    Wt_last = jnp.pad(Wt_full[:, (n - 1) * F:],
                      ((0, Dp - D), (0, Fp_out - F))).astype(cdt)

    bias_first_p = jnp.pad(bias_first, (0, Dp - D)).astype(jnp.float32)
    bias_all_p = jnp.pad(bias_all, (0, Dp - D)).astype(jnp.float32)
    bias_last_first = jnp.pad(b_blocks[n - 1, 0, :], (0, Fp_out - F)).astype(jnp.float32)
    bias_last_all = jnp.pad(jnp.sum(b_blocks[n - 1], axis=0),
                            (0, Fp_out - F)).astype(jnp.float32)

    bias_pack = (jnp.zeros((8, Dp), jnp.float32)
                 .at[0].set(bias_first_p)
                 .at[1].set(bias_all_p)
                 .at[2, :Fp_out].set(bias_last_first)
                 .at[3, :Fp_out].set(bias_last_all))

    # Only block-0 input columns are shipped to the kernel (everything else is None).
    xc = jnp.zeros((Bp, Fp_in), jnp.float32).at[:B, :F].set(x0.astype(jnp.float32))

    # ---- VMEM budget & path selection -----------------------------------------
    itemsize = cdt.itemsize
    est_single = (Dp * Dp * itemsize            # resident Wt (single buffer)
                  + Dp * Fp_out * itemsize      # resident Wt_last
                  + 2 * tm * Fp_in * 4          # input (double buffered)
                  + 2 * tm * Fp_out * 4         # output (double buffered)
                  + 8 * Dp * 4                  # packed biases
                  + tm * Dp * 4                 # activation scratch
                  + 2 * tm * Dp * 4)            # matmul-result / relayout headroom
    est_double = est_single + (Dp * Dp + Dp * Fp_out) * itemsize + 8 * Dp * 4
    budget = int(0.75 * vmem_cap)
    vmem_limit = max(32 << 20, int(0.9 * vmem_cap))
    use_resident = (not force_fallback) and (est_single <= budget)

    def _resident_call(single_buffer):
        kwargs = dict(pipeline_mode=pl.Buffered(1)) if single_buffer else {}
        grid_spec = pltpu.PrefetchScalarGridSpec(
            num_scalar_prefetch=0,
            grid=(num_tiles,),
            in_specs=[
                pl.BlockSpec((tm, Fp_in), lambda i: (i, 0)),
                pl.BlockSpec((Dp, Dp), lambda i: (0, 0), **kwargs),
                pl.BlockSpec((Dp, Fp_out), lambda i: (0, 0), **kwargs),
                pl.BlockSpec((8, Dp), lambda i: (0, 0), **kwargs),
            ],
            out_specs=pl.BlockSpec((tm, Fp_out), lambda i: (i, 0)),
            scratch_shapes=[pltpu.VMEM((tm, Dp), jnp.float32)],
        )
        kernel = functools.partial(
            _fused_iter_kernel,
            num_iterations=T, fp_in=Fp_in, fp_out=Fp_out,
            unroll=bool(Dp <= 512 and T <= 8))
        return pl.pallas_call(
            kernel,
            out_shape=jax.ShapeDtypeStruct((Bp, Fp_out), jnp.float32),
            grid_spec=grid_spec,
            compiler_params=pltpu.CompilerParams(
                dimension_semantics=("parallel",),      # shards batch over TCs on v7x
                vmem_limit_bytes=vmem_limit),
        )(xc, Wt, Wt_last, bias_pack)

    def _fallback():
        bias_first_t = _bias_tile(bias_first_p, Dp)
        bias_all_t = _bias_tile(bias_all_p, Dp)
        bias_lf_t = _bias_tile(bias_last_first, Fp_out)
        bias_la_t = _bias_tile(bias_last_all, Fp_out)
        if T == 1:
            return _tiled_linear_relu(xc, Wt_last[:Fp_in, :], bias_lf_t,
                                      tm=tm, vmem_cap=vmem_cap)
        x = _tiled_linear_relu(xc, Wt[:Fp_in, :], bias_first_t,
                               tm=tm, vmem_cap=vmem_cap)
        for _ in range(1, T - 1):
            x = _tiled_linear_relu(x, Wt, bias_all_t, tm=tm, vmem_cap=vmem_cap)
        return _tiled_linear_relu(x, Wt_last, bias_la_t, tm=tm, vmem_cap=vmem_cap)

    result = None
    if use_resident:
        try:
            result = _resident_call(single_buffer=True)
        except Exception:
            result = None
        if result is None and est_double <= budget:
            try:
                result = _resident_call(single_buffer=False)
            except Exception:
                result = None
    if result is None:
        result = _fallback()

    # X[-1] = last block, unpadded rows/columns.
    return result[:B, :F].astype(out_dtype)


# ---------------------------------------------------------------------------
# pure-JAX reference (list-of-blocks semantics, mirrors the PyTorch module)
# ---------------------------------------------------------------------------
def reference(x0, W_blocks, b_blocks, num_iterations):
    n = W_blocks.shape[0]
    X = [x0] + [None] * (n - 1)
    for _ in range(num_iterations):
        Y = []
        for i in range(n):
            acc = None
            for j in range(n):
                if X[j] is None:
                    continue
                contrib = X[j] @ W_blocks[i, j].T + b_blocks[i, j]
                acc = contrib if acc is None else acc + contrib
            Y.append(acc)
        X = [jnp.maximum(y, 0.0) if y is not None else None for y in Y]
    return X[-1]


if __name__ == "__main__":
    def _run_case(name, n_blocks, F, B, T, *, compute_dtype, force_fallback,
                  atol, rtol):
        key = jax.random.PRNGKey(0)
        kx, kw, kb = jax.random.split(key, 3)
        x0 = jax.random.normal(kx, (B, F), dtype=jnp.float32)
        W_blocks = 0.1 * jax.random.normal(
            kw, (n_blocks, n_blocks, F, F), dtype=jnp.float32)
        b_blocks = 0.1 * jax.random.normal(
            kb, (n_blocks, n_blocks, F), dtype=jnp.float32)

        out = iterative_sequential2d(x0, W_blocks, b_blocks, T,
                                     compute_dtype=compute_dtype,
                                     force_fallback=force_fallback)
        out = jax.block_until_ready(out)
        ref = reference(x0, W_blocks, b_blocks, T)
        assert out.shape == (B, F), (name, out.shape)
        err = float(jnp.max(jnp.abs(out - ref)))
        assert jnp.allclose(out, ref, atol=atol, rtol=rtol), (name, err)

    # strict f32 checks (fused resident-weight path)
    _run_case("f32_fused", 4, 32, 8, 3,
              compute_dtype=jnp.float32, force_fallback=False, atol=1e-4, rtol=1e-4)
    _run_case("f32_single_iter", 3, 48, 20, 1,
              compute_dtype=jnp.float32, force_fallback=False, atol=1e-4, rtol=1e-4)
    _run_case("f32_multi_tile", 4, 32, 300, 2,
              compute_dtype=jnp.float32, force_fallback=False, atol=1e-4, rtol=1e-4)
    # default bf16 compute (MXU-native) -- looser tolerance vs the f32 reference
    _run_case("bf16_fused", 4, 32, 8, 3,
              compute_dtype=jnp.bfloat16, force_fallback=False, atol=5e-2, rtol=5e-2)
    # tiled K/N fallback path (used automatically when D^2 does not fit VMEM)
    _run_case("f32_tiled_fallback", 4, 32, 8, 3,
              compute_dtype=jnp.float32, force_fallback=True, atol=1e-4, rtol=1e-4)

    print("KERNEL_OK")
</pallas_src>

<mosaic_0001>
module attributes {stable_mosaic.version = 11 : i64} {
  func.func @_fused_iter_kernel(%arg0: i32, %arg1: memref<8x128xf32, #tpu.memory_space<vmem>>, %arg2: memref<128x128xf32, #tpu.memory_space<vmem>>, %arg3: memref<128x128xf32, #tpu.memory_space<vmem>>, %arg4: memref<8x128xf32, #tpu.memory_space<vmem>>, %arg5: memref<8x128xf32, #tpu.memory_space<vmem>>, %arg6: memref<8x128xf32, #tpu.memory_space<vmem>>) attributes {dimension_semantics = [#tpu.dimension_semantics<parallel>], iteration_bounds = array<i64: 1>, scalar_prefetch = 0 : i64, scratch_operands = 1 : i64, tpu.core_type = #tpu.core_type<tc>, window_params = [{transform_indices = @transform_0, window_bounds = array<i64: 8, 128>}, {pipeline_mode = #tpu.pipeline_mode<synchronous>, transform_indices = @transform_1, window_bounds = array<i64: 128, 128>}, {pipeline_mode = #tpu.pipeline_mode<synchronous>, transform_indices = @transform_2, window_bounds = array<i64: 128, 128>}, {pipeline_mode = #tpu.pipeline_mode<synchronous>, transform_indices = @transform_3, window_bounds = array<i64: 8, 128>}, {transform_indices = @transform_4, window_bounds = array<i64: 8, 128>}]} {
    %c0 = arith.constant 0 : index
    %c0_0 = arith.constant 0 : index
    %0 = vector.load %arg1[%c0, %c0_0] : memref<8x128xf32, #tpu.memory_space<vmem>>, vector<8x128xf32>
    %c0_1 = arith.constant 0 : index
    %c0_2 = arith.constant 0 : index
    %1 = vector.load %arg2[%c0_1, %c0_2] : memref<128x128xf32, #tpu.memory_space<vmem>>, vector<128x128xf32>
    %cst = arith.constant dense<0.000000e+00> : vector<8x128xf32>
    %2 = tpu.matmul %0, %1, %cst {dimension_numbers = #tpu.dot_dimension_numbers<[1], [0], [0], [1], [0, 0, 1, 1], [], []>} : vector<8x128xf32>, vector<128x128xf32>, vector<8x128xf32> -> vector<8x128xf32>
    %c0_3 = arith.constant 0 : index
    %c0_4 = arith.constant 0 : index
    %3 = vector.load %arg4[%c0_3, %c0_4] : memref<8x128xf32, #tpu.memory_space<vmem>>, vector<1x128xf32>
    %4 = vector.broadcast %3 : vector<1x128xf32> to vector<8x128xf32>
    %5 = arith.addf %2, %4 : vector<8x128xf32>
    %cst_5 = arith.constant 0.000000e+00 : f32
    %6 = vector.broadcast %cst_5 : f32 to vector<8x128xf32>
    %7 = arith.maximumf %5, %6 : vector<8x128xf32>
    %c0_6 = arith.constant 0 : index
    %c0_7 = arith.constant 0 : index
    %8 = vector.load %arg6[%c0_6, %c0_7] : memref<8x128xf32, #tpu.memory_space<vmem>>, vector<8x128xf32>
    tpu.vector_store %arg6[%c0_6, %c0_7], %7 {strides = array<i32>} : memref<8x128xf32, #tpu.memory_space<vmem>>, vector<8x128xf32>,
    %c0_i32 = arith.constant 0 : i32
    %c0_8 = arith.constant 0 : index
    %c0_9 = arith.constant 0 : index
    %9 = vector.load %arg6[%c0_8, %c0_9] : memref<8x128xf32, #tpu.memory_space<vmem>>, vector<8x128xf32>
    %c0_10 = arith.constant 0 : index
    %c0_11 = arith.constant 0 : index
    %10 = vector.load %arg2[%c0_10, %c0_11] : memref<128x128xf32, #tpu.memory_space<vmem>>, vector<128x128xf32>
    %cst_12 = arith.constant dense<0.000000e+00> : vector<8x128xf32>
    %11 = tpu.matmul %9, %10, %cst_12 {dimension_numbers = #tpu.dot_dimension_numbers<[1], [0], [0], [1], [0, 0, 1, 1], [], []>} : vector<8x128xf32>, vector<128x128xf32>, vector<8x128xf32> -> vector<8x128xf32>
    %c1 = arith.constant 1 : index
    %c0_13 = arith.constant 0 : index
    %12 = vector.load %arg4[%c1, %c0_13] : memref<8x128xf32, #tpu.memory_space<vmem>>, vector<1x128xf32>
    %13 = vector.broadcast %12 : vector<1x128xf32> to vector<8x128xf32>
    %14 = arith.addf %11, %13 : vector<8x128xf32>
    %cst_14 = arith.constant 0.000000e+00 : f32
    %15 = vector.broadcast %cst_14 : f32 to vector<8x128xf32>
    %16 = arith.maximumf %14, %15 : vector<8x128xf32>
    %c0_15 = arith.constant 0 : index
    %c0_16 = arith.constant 0 : index
    %17 = vector.load %arg6[%c0_15, %c0_16] : memref<8x128xf32, #tpu.memory_space<vmem>>, vector<8x128xf32>
    tpu.vector_store %arg6[%c0_15, %c0_16], %16 {strides = array<i32>} : memref<8x128xf32, #tpu.memory_space<vmem>>, vector<8x128xf32>,
    %c0_17 = arith.constant 0 : index
    %c0_18 = arith.constant 0 : index
    %18 = vector.load %arg6[%c0_17, %c0_18] : memref<8x128xf32, #tpu.memory_space<vmem>>, vector<8x128xf32>
    %c0_19 = arith.constant 0 : index
    %c0_20 = arith.constant 0 : index
    %19 = vector.load %arg3[%c0_19, %c0_20] : memref<128x128xf32, #tpu.memory_space<vmem>>, vector<128x128xf32>
    %cst_21 = arith.constant dense<0.000000e+00> : vector<8x128xf32>
    %20 = tpu.matmul %18, %19, %cst_21 {dimension_numbers = #tpu.dot_dimension_numbers<[1], [0], [0], [1], [0, 0, 1, 1], [], []>} : vector<8x128xf32>, vector<128x128xf32>, vector<8x128xf32> -> vector<8x128xf32>
    %c3 = arith.constant 3 : index
    %c0_22 = arith.constant 0 : index
    %21 = vector.load %arg4[%c3, %c0_22] : memref<8x128xf32, #tpu.memory_space<vmem>>, vector<1x128xf32>
    %22 = vector.broadcast %21 : vector<1x128xf32> to vector<8x128xf32>
    %23 = arith.addf %20, %22 : vector<8x128xf32>
    %cst_23 = arith.constant 0.000000e+00 : f32
    %24 = vector.broadcast %cst_23 : f32 to vector<8x128xf32>
    %25 = arith.maximumf %23, %24 : vector<8x128xf32>
    %c0_24 = arith.constant 0 : index
    %c0_25 = arith.constant 0 : index
    %26 = vector.load %arg5[%c0_24, %c0_25] : memref<8x128xf32, #tpu.memory_space<vmem>>, vector<8x128xf32>
    tpu.vector_store %arg5[%c0_24, %c0_25], %25 {strides = array<i32>} : memref<8x128xf32, #tpu.memory_space<vmem>>, vector<8x128xf32>,
    return
  }
  func.func @transform_0(%arg0: i32) -> (i32, i32) {
    %c0_i32 = arith.constant 0 : i32
    %c0_i32_0 = arith.constant 0 : i32
    return %arg0, %c0_i32 : i32, i32
  }
  func.func @transform_1(%arg0: i32) -> (i32, i32) {
    %c0_i32 = arith.constant 0 : i32
    %c0_i32_0 = arith.constant 0 : i32
    %c0_i32_1 = arith.constant 0 : i32
    return %c0_i32, %c0_i32_0 : i32, i32
  }
  func.func @transform_2(%arg0: i32) -> (i32, i32) {
    %c0_i32 = arith.constant 0 : i32
    %c0_i32_0 = arith.constant 0 : i32
    %c0_i32_1 = arith.constant 0 : i32
    return %c0_i32, %c0_i32_0 : i32, i32
  }
  func.func @transform_3(%arg0: i32) -> (i32, i32) {
    %c0_i32 = arith.constant 0 : i32
    %c0_i32_0 = arith.constant 0 : i32
    %c0_i32_1 = arith.constant 0 : i32
    return %c0_i32, %c0_i32_0 : i32, i32
  }
  func.func @transform_4(%arg0: i32) -> (i32, i32) {
    %c0_i32 = arith.constant 0 : i32
    %c0_i32_0 = arith.constant 0 : i32
    return %arg0, %c0_i32 : i32, i32
  }
}

module attributes {stable_mosaic.version = 11 : i64} {
  func.func @_fused_iter_kernel(%arg0: i32, %arg1: memref<8x128xf32, #tpu.memory_space<vmem>>, %arg2: memref<128x128xf32, #tpu.memory_space<vmem>>, %arg3: memref<128x128xf32, #tpu.memory_space<vmem>>, %arg4: memref<8x128xf32, #tpu.memory_space<vmem>>, %arg5: memref<8x128xf32, #tpu.memory_space<vmem>>, %arg6: memref<8x128xf32, #tpu.memory_space<vmem>>) attributes {dimension_semantics = [#tpu.dimension_semantics<parallel>], iteration_bounds = array<i64: 1>, scalar_prefetch = 0 : i64, scratch_operands = 1 : i64, tpu.core_type = #tpu.core_type<tc>, window_params = [{transform_indices = @transform_0, window_bounds = array<i64: 8, 128>}, {pipeline_mode = #tpu.pipeline_mode<synchronous>, transform_indices = @transform_1, window_bounds = array<i64: 128, 128>}, {pipeline_mode = #tpu.pipeline_mode<synchronous>, transform_indices = @transform_2, window_bounds = array<i64: 128, 128>}, {pipeline_mode = #tpu.pipeline_mode<synchronous>, transform_indices = @transform_3, window_bounds = array<i64: 8, 128>}, {transform_indices = @transform_4, window_bounds = array<i64: 8, 128>}]} {
    %c0 = arith.constant 0 : index
    %c0_0 = arith.constant 0 : index
    %0 = vector.load %arg1[%c0, %c0_0] : memref<8x128xf32, #tpu.memory_space<vmem>>, vector<8x128xf32>
    %c0_1 = arith.constant 0 : index
    %c0_2 = arith.constant 0 : index
    %1 = vector.load %arg2[%c0_1, %c0_2] : memref<128x128xf32, #tpu.memory_space<vmem>>, vector<128x128xf32>
    %cst = arith.constant dense<0.000000e+00> : vector<8x128xf32>
    %2 = tpu.matmul %0, %1, %cst {dimension_numbers = #tpu.dot_dimension_numbers<[1], [0], [0], [1], [0, 0, 1, 1], [], []>} : vector<8x128xf32>, vector<128x128xf32>, vector<8x128xf32> -> vector<8x128xf32>
    %c0_3 = arith.constant 0 : index
    %c0_4 = arith.constant 0 : index
    %3 = vector.load %arg4[%c0_3, %c0_4] : memref<8x128xf32, #tpu.memory_space<vmem>>, vector<1x128xf32>
    %4 = vector.broadcast %3 : vector<1x128xf32> to vector<8x128xf32>
    %5 = arith.addf %2, %4 : vector<8x128xf32>
    %cst_5 = arith.constant 0.000000e+00 : f32
    %6 = vector.broadcast %cst_5 : f32 to vector<8x128xf32>
    %7 = arith.maximumf %5, %6 : vector<8x128xf32>
    %c0_6 = arith.constant 0 : index
    %c0_7 = arith.constant 0 : index
    %8 = vector.load %arg6[%c0_6, %c0_7] : memref<8x128xf32, #tpu.memory_space<vmem>>, vector<8x128xf32>
    tpu.vector_store %arg6[%c0_6, %c0_7], %7 {strides = array<i32>} : memref<8x128xf32, #tpu.memory_space<vmem>>, vector<8x128xf32>,
    %c0_i32 = arith.constant 0 : i32
    %c0_8 = arith.constant 0 : index
    %c0_9 = arith.constant 0 : index
    %9 = vector.load %arg6[%c0_8, %c0_9] : memref<8x128xf32, #tpu.memory_space<vmem>>, vector<8x128xf32>
    %c0_10 = arith.constant 0 : index
    %c0_11 = arith.constant 0 : index
    %10 = vector.load %arg2[%c0_10, %c0_11] : memref<128x128xf32, #tpu.memory_space<vmem>>, vector<128x128xf32>
    %cst_12 = arith.constant dense<0.000000e+00> : vector<8x128xf32>
    %11 = tpu.matmul %9, %10, %cst_12 {dimension_numbers = #tpu.dot_dimension_numbers<[1], [0], [0], [1], [0, 0, 1, 1], [], []>} : vector<8x128xf32>, vector<128x128xf32>, vector<8x128xf32> -> vector<8x128xf32>
    %c1 = arith.constant 1 : index
    %c0_13 = arith.constant 0 : index
    %12 = vector.load %arg4[%c1, %c0_13] : memref<8x128xf32, #tpu.memory_space<vmem>>, vector<1x128xf32>
    %13 = vector.broadcast %12 : vector<1x128xf32> to vector<8x128xf32>
    %14 = arith.addf %11, %13 : vector<8x128xf32>
    %cst_14 = arith.constant 0.000000e+00 : f32
    %15 = vector.broadcast %cst_14 : f32 to vector<8x128xf32>
    %16 = arith.maximumf %14, %15 : vector<8x128xf32>
    %c0_15 = arith.constant 0 : index
    %c0_16 = arith.constant 0 : index
    %17 = vector.load %arg6[%c0_15, %c0_16] : memref<8x128xf32, #tpu.memory_space<vmem>>, vector<8x128xf32>
    tpu.vector_store %arg6[%c0_15, %c0_16], %16 {strides = array<i32>} : memref<8x128xf32, #tpu.memory_space<vmem>>, vector<8x128xf32>,
    %c0_17 = arith.constant 0 : index
    %c0_18 = arith.constant 0 : index
    %18 = vector.load %arg6[%c0_17, %c0_18] : memref<8x128xf32, #tpu.memory_space<vmem>>, vector<8x128xf32>
    %c0_19 = arith.constant 0 : index
    %c0_20 = arith.constant 0 : index
    %19 = vector.load %arg3[%c0_19, %c0_20] : memref<128x128xf32, #tpu.memory_space<vmem>>, vector<128x128xf32>
    %cst_21 = arith.constant dense<0.000000e+00> : vector<8x128xf32>
    %20 = tpu.matmul %18, %19, %cst_21 {dimension_numbers = #tpu.dot_dimension_numbers<[1], [0], [0], [1], [0, 0, 1, 1], [], []>} : vector<8x128xf32>, vector<128x128xf32>, vector<8x128xf32> -> vector<8x128xf32>
    %c3 = arith.constant 3 : index
    %c0_22 = arith.constant 0 : index
    %21 = vector.load %arg4[%c3, %c0_22] : memref<8x128xf32, #tpu.memory_space<vmem>>, vector<1x128xf32>
    %22 = vector.broadcast %21 : vector<1x128xf32> to vector<8x128xf32>
    %23 = arith.addf %20, %22 : vector<8x128xf32>
    %cst_23 = arith.constant 0.000000e+00 : f32
    %24 = vector.broadcast %cst_23 : f32 to vector<8x128xf32>
    %25 = arith.maximumf %23, %24 : vector<8x128xf32>
    %c0_24 = arith.constant 0 : index
    %c0_25 = arith.constant 0 : index
    %26 = vector.load %arg5[%c0_24, %c0_25] : memref<8x128xf32, #tpu.memory_space<vmem>>, vector<8x128xf32>
    tpu.vector_store %arg5[%c0_24, %c0_25], %25 {strides = array<i32>} : memref<8x128xf32, #tpu.memory_space<vmem>>, vector<8x128xf32>,
    return
  }
  func.func @transform_0(%arg0: i32) -> (i32, i32) {
    %c0_i32 = arith.constant 0 : i32
    %c0_i32_0 = arith.constant 0 : i32
    return %arg0, %c0_i32 : i32, i32
  }
  func.func @transform_1(%arg0: i32) -> (i32, i32) {
    %c0_i32 = arith.constant 0 : i32
    %c0_i32_0 = arith.constant 0 : i32
    %c0_i32_1 = arith.constant 0 : i32
    return %c0_i32, %c0_i32_0 : i32, i32
  }
  func.func @transform_2(%arg0: i32) -> (i32, i32) {
    %c0_i32 = arith.constant 0 : i32
    %c0_i32_0 = arith.constant 0 : i32
    %c0_i32_1 = arith.constant 0 : i32
    return %c0_i32, %c0_i32_0 : i32, i32
  }
  func.func @transform_3(%arg0: i32) -> (i32, i32) {
    %c0_i32 = arith.constant 0 : i32
    %c0_i32_0 = arith.constant 0 : i32
    %c0_i32_1 = arith.constant 0 : i32
    return %c0_i32, %c0_i32_0 : i32, i32
  }
  func.func @transform_4(%arg0: i32) -> (i32, i32) {
    %c0_i32 = arith.constant 0 : i32
    %c0_i32_0 = arith.constant 0 : i32
    return %arg0, %c0_i32 : i32, i32
  }
}

module attributes {stable_mosaic.version = 11 : i64} {
  func.func @_tiled_step_kernel(%arg0: i32, %arg1: i32, %arg2: i32, %arg3: memref<8x128xf32, #tpu.memory_space<vmem>>, %arg4: memref<128x128xf32, #tpu.memory_space<vmem>>, %arg5: memref<8x128xf32, #tpu.memory_space<vmem>>, %arg6: memref<8x128xf32, #tpu.memory_space<vmem>>, %arg7: memref<8x128xf32, #tpu.memory_space<vmem>>) attributes {dimension_semantics = [#tpu.dimension_semantics<parallel>, #tpu.dimension_semantics<parallel>, #tpu.dimension_semantics<arbitrary>], iteration_bounds = array<i64: 1, 1, 1>, scalar_prefetch = 0 : i64, scratch_operands = 1 : i64, tpu.core_type = #tpu.core_type<tc>, window_params = [{transform_indices = @transform_0, window_bounds = array<i64: 8, 128>}, {transform_indices = @transform_1, window_bounds = array<i64: 128, 128>}, {transform_indices = @transform_2, window_bounds = array<i64: 8, 128>}, {transform_indices = @transform_3, window_bounds = array<i64: 8, 128>}]} {
    %c0_i32 = arith.constant 0 : i32
    %0 = arith.cmpi eq, %arg2, %c0_i32 : i32
    %1 = arith.extui %0 : i1 to i32
    %c0_i32_0 = arith.constant 0 : i32
    %2 = arith.cmpi ne, %1, %c0_i32_0 : i32
    scf.if %2 {
      %cst_10 = arith.constant 0.000000e+00 : f32
      %12 = vector.broadcast %cst_10 : f32 to vector<8x128xf32>
      %c0_11 = arith.constant 0 : index
      %c0_12 = arith.constant 0 : index
      %13 = vector.load %arg7[%c0_11, %c0_12] : memref<8x128xf32, #tpu.memory_space<vmem>>, vector<8x128xf32>
      tpu.vector_store %arg7[%c0_11, %c0_12], %12 {strides = array<i32>} : memref<8x128xf32, #tpu.memory_space<vmem>>, vector<8x128xf32>,
    } else {
    }
    %c0 = arith.constant 0 : index
    %c0_1 = arith.constant 0 : index
    %3 = vector.load %arg7[%c0, %c0_1] : memref<8x128xf32, #tpu.memory_space<vmem>>, vector<8x128xf32>
    %c0_2 = arith.constant 0 : index
    %c0_3 = arith.constant 0 : index
    %4 = vector.load %arg3[%c0_2, %c0_3] : memref<8x128xf32, #tpu.memory_space<vmem>>, vector<8x128xf32>
    %c0_4 = arith.constant 0 : index
    %c0_5 = arith.constant 0 : index
    %5 = vector.load %arg4[%c0_4, %c0_5] : memref<128x128xf32, #tpu.memory_space<vmem>>, vector<128x128xf32>
    %cst = arith.constant dense<0.000000e+00> : vector<8x128xf32>
    %6 = tpu.matmul %4, %5, %cst {dimension_numbers = #tpu.dot_dimension_numbers<[1], [0], [0], [1], [0, 0, 1, 1], [], []>} : vector<8x128xf32>, vector<128x128xf32>, vector<8x128xf32> -> vector<8x128xf32>
    %7 = arith.addf %3, %6 : vector<8x128xf32>
    %c0_6 = arith.constant 0 : index
    %c0_7 = arith.constant 0 : index
    %8 = vector.load %arg7[%c0_6, %c0_7] : memref<8x128xf32, #tpu.memory_space<vmem>>, vector<8x128xf32>
    tpu.vector_store %arg7[%c0_6, %c0_7], %7 {strides = array<i32>} : memref<8x128xf32, #tpu.memory_space<vmem>>, vector<8x128xf32>,
    %c0_i32_8 = arith.constant 0 : i32
    %9 = arith.cmpi eq, %arg2, %c0_i32_8 : i32
    %10 = arith.extui %9 : i1 to i32
    %c0_i32_9 = arith.constant 0 : i32
    %11 = arith.cmpi ne, %10, %c0_i32_9 : i32
    scf.if %11 {
      %c0_10 = arith.constant 0 : index
      %c0_11 = arith.constant 0 : index
      %12 = vector.load %arg7[%c0_10, %c0_11] : memref<8x128xf32, #tpu.memory_space<vmem>>, vector<8x128xf32>
      %c0_12 = arith.constant 0 : index
      %c0_13 = arith.constant 0 : index
      %13 = vector.load %arg5[%c0_12, %c0_13] : memref<8x128xf32, #tpu.memory_space<vmem>>, vector<1x128xf32>
      %14 = vector.broadcast %13 : vector<1x128xf32> to vector<8x128xf32>
      %15 = arith.addf %12, %14 : vector<8x128xf32>
      %cst_14 = arith.constant 0.000000e+00 : f32
      %16 = vector.broadcast %cst_14 : f32 to vector<8x128xf32>
      %17 = arith.maximumf %15, %16 : vector<8x128xf32>
      %c0_15 = arith.constant 0 : index
      %c0_16 = arith.constant 0 : index
      %18 = vector.load %arg6[%c0_15, %c0_16] : memref<8x128xf32, #tpu.memory_space<vmem>>, vector<8x128xf32>
      tpu.vector_store %arg6[%c0_15, %c0_16], %17 {strides = array<i32>} : memref<8x128xf32, #tpu.memory_space<vmem>>, vector<8x128xf32>,
    } else {
    }
    return
  }
  func.func @transform_0(%arg0: i32, %arg1: i32, %arg2: i32) -> (i32, i32) {
    %c0_i32 = arith.constant 0 : i32
    return %arg0, %arg2 : i32, i32
  }
  func.func @transform_1(%arg0: i32, %arg1: i32, %arg2: i32) -> (i32, i32) {
    %c0_i32 = arith.constant 0 : i32
    return %arg2, %arg1 : i32, i32
  }
  func.func @transform_2(%arg0: i32, %arg1: i32, %arg2: i32) -> (i32, i32) {
    %c0_i32 = arith.constant 0 : i32
    %c0_i32_0 = arith.constant 0 : i32
    return %c0_i32, %arg1 : i32, i32
  }
  func.func @transform_3(%arg0: i32, %arg1: i32, %arg2: i32) -> (i32, i32) {
    %c0_i32 = arith.constant 0 : i32
    return %arg0, %arg1 : i32, i32
  }
}

</mosaic_0001>

<llo_original>
// kernel: tpu_custom_call.1
$region0: #{tpu_custom_call.1}
  #allocation0 [shape = 'u32[]', space=smem, size = 0x4, offset = 0x4, fixed_abs, tag = 'smem constant byte address 0x4 - core index']
  #allocation1 [shape = 'u32[144,128]{1,0:T(1,128)}', space=vmem, size = 0x12000, scoped, tag = 'internal scratch']
  #allocation2 [shape = 'f32[8,128]{1,0:T(8,128)}', space=vmem, size = 0x1000, scoped, tag = 'scratch operand']
  %s0 = inlined_call_operand.hbm [shape: f32[8,128], index: 0, kind: input, shape index: {}]
  %s1 = inlined_call_operand.hbm [shape: f32[128,128], index: 1, kind: input, shape index: {}]
  %s2 = inlined_call_operand.hbm [shape: f32[128,128], index: 2, kind: input, shape index: {}]
  %s3 = inlined_call_operand.hbm [shape: f32[8,128], index: 3, kind: input, shape index: {}]
  %s4 = inlined_call_operand.hbm [shape: f32[8,128], index: 4, kind: output, shape index: {}]
  %s5 = sld [smem:[#allocation0]]
  $region42: #{tpu_custom_call.1} parent=0
    _
  %s7 = ssub.s32 1, %s5
  %s8 = scalar_select 0, %s7, %s5
  $region1: #{tpu_custom_call.1} parent=0
    #allocation3 [shape = 'u8[4096]{0}', space=vmem, size = 0x1000, scoped, tag = 'input window, operand 0, single buffered']
    #allocation4 [shape = 's32[1]{0}', space=sflag, size = 0x4, scoped, tag = 'scoped memory for tpu_custom_call.1']
    #allocation5 [shape = 's32[1]{0}', space=sflag, size = 0x4, scoped, tag = 'scoped memory for tpu_custom_call.1']
    #allocation6 [shape = 'u8[65536]{0}', space=vmem, size = 0x10000, scoped, tag = 'input window, operand 1, single buffered']
    #allocation7 [shape = 's32[1]{0}', space=sflag, size = 0x4, scoped, tag = 'scoped memory for tpu_custom_call.1']
    #allocation8 [shape = 'u8[65536]{0}', space=vmem, size = 0x10000, scoped, tag = 'input window, operand 2, single buffered']
    #allocation9 [shape = 'u8[4096]{0}', space=vmem, size = 0x1000, scoped, tag = 'input window, operand 3, single buffered']
    #allocation10 [shape = 's32[1]{0}', space=sflag, size = 0x4, scoped, tag = 'scoped memory for tpu_custom_call.1']
    #allocation11 [shape = 'u8[4096]{0}', space=vmem, size = 0x1000, scoped, tag = 'output window, operand 0, single buffered']
    %9 = vsyncpa [#allocation4], 0
    %10 = vsyncpa [#allocation7], 0
    %11 = vsyncpa [#allocation10], 0
    %12 = vsyncpa [#allocation5], 0
    // Predicated region
    $region2: #{tpu_custom_call.1} parent=1 // pred_check
      _
    $region3: #{tpu_custom_call.1} parent=1 // pred_check_branch
      %14 = sbr.rel (0) target = $region5
    $region4: #{tpu_custom_call.1} parent=1 // pred_region
      %s16 = ssub.s32 128, 128
      %17 = vsyncadd [#allocation4], %s16
      %s19 = sshll.u32 [#allocation3], 4
      %s20 = int_to_ptr.vmem [resolvable:$true] %s19
      %22 = dma.hbm_to_vmem [thread:$0]  %s0, 128, %s20, [#allocation4]
    $region5: #{tpu_custom_call.1} parent=1 // pred_fallthru
      _
    // Predicated region
    $region6: #{tpu_custom_call.1} parent=1 // pred_check
      _
    $region7: #{tpu_custom_call.1} parent=1 // pred_check_branch
      %24 = sbr.rel (0) target = $region9
    $region8: #{tpu_custom_call.1} parent=1 // pred_region
      %s26 = ssub.s32 2048, 2048
      %27 = vsyncadd [#allocation7], %s26
      %s28 = sshll.u32 [#allocation6], 4
      %s29 = int_to_ptr.vmem [resolvable:$true] %s28
      %34 = dma.hbm_to_vmem [thread:$0]  %s1, 2048, %s29, [#allocation7], 128, 128, 8
    $region9: #{tpu_custom_call.1} parent=1 // pred_fallthru
      _
    // Predicated region
    $region10: #{tpu_custom_call.1} parent=1 // pred_check
      _
    $region11: #{tpu_custom_call.1} parent=1 // pred_check_branch
      %36 = sbr.rel (0) target = $region13
    $region12: #{tpu_custom_call.1} parent=1 // pred_region
      %s38 = ssub.s32 2048, 2048
      %39 = vsyncadd [#allocation7], %s38
      %s40 = sshll.u32 [#allocation8], 4
      %s41 = int_to_ptr.vmem [resolvable:$true] %s40
      %46 = dma.hbm_to_vmem [thread:$0]  %s2, 2048, %s41, [#allocation7], 128, 128, 8
    $region13: #{tpu_custom_call.1} parent=1 // pred_fallthru
      _
    // Predicated region
    $region14: #{tpu_custom_call.1} parent=1 // pred_check
      _
    $region15: #{tpu_custom_call.1} parent=1 // pred_check_branch
      %48 = sbr.rel (0) target = $region17
    $region16: #{tpu_custom_call.1} parent=1 // pred_region
      %s50 = ssub.s32 128, 128
      %51 = vsyncadd [#allocation10], %s50
      %s53 = sshll.u32 [#allocation9], 4
      %s54 = int_to_ptr.vmem [resolvable:$true] %s53
      %56 = dma.hbm_to_vmem [thread:$0]  %s3, 128, %s54, [#allocation10]
    $region17: #{tpu_custom_call.1} parent=1 // pred_fallthru
      _
    // Predicated region
    $region18: #{tpu_custom_call.1} parent=1 // pred_check
      _
    $region19: #{tpu_custom_call.1} parent=1 // pred_check_branch
      %58 = sbr.rel (0) target = $region21
    $region20: #{tpu_custom_call.1} parent=1 // pred_region
      %59 = dma.done [#allocation4], 128
    $region21: #{tpu_custom_call.1} parent=1 // pred_fallthru
      _
    // Predicated region
    $region22: #{tpu_custom_call.1} parent=1 // pred_check
      _
    $region23: #{tpu_custom_call.1} parent=1 // pred_check_branch
      %61 = sbr.rel (0) target = $region25
    $region24: #{tpu_custom_call.1} parent=1 // pred_region
      %62 = dma.done [#allocation7], 2048
    $region25: #{tpu_custom_call.1} parent=1 // pred_fallthru
      _
    // Predicated region
    $region26: #{tpu_custom_call.1} parent=1 // pred_check
      _
    $region27: #{tpu_custom_call.1} parent=1 // pred_check_branch
      %64 = sbr.rel (0) target = $region29
    $region28: #{tpu_custom_call.1} parent=1 // pred_region
      %65 = dma.done [#allocation7], 2048
    $region29: #{tpu_custom_call.1} parent=1 // pred_fallthru
      _
    // Predicated region
    $region30: #{tpu_custom_call.1} parent=1 // pred_check
      _
    $region31: #{tpu_custom_call.1} parent=1 // pred_check_branch
      %67 = sbr.rel (0) target = $region33
    $region32: #{tpu_custom_call.1} parent=1 // pred_region
      %68 = dma.done [#allocation10], 128
    $region33: #{tpu_custom_call.1} parent=1 // pred_fallthru
      _
    %v69 = vld [vmem:[#allocation3] sm:$0xff]
    %v70 = vld [vmem:[#allocation6] sm:$0xff]
    %v71 = vld [vmem:[#allocation6 + $0x8] sm:$0xff]
    %v72 = vld [vmem:[#allocation6 + $0x10] sm:$0xff]
    %v73 = vld [vmem:[#allocation6 + $0x18] sm:$0xff]
    %v74 = vld [vmem:[#allocation6 + $0x20] sm:$0xff]
    %v75 = vld [vmem:[#allocation6 + $0x28] sm:$0xff]
    %v76 = vld [vmem:[#allocation6 + $0x30] sm:$0xff]
    %v77 = vld [vmem:[#allocation6 + $0x38] sm:$0xff]
    %v78 = vld [vmem:[#allocation6 + $0x40] sm:$0xff]
    %v79 = vld [vmem:[#allocation6 + $0x48] sm:$0xff]
    %v80 = vld [vmem:[#allocation6 + $0x50] sm:$0xff]
    %v81 = vld [vmem:[#allocation6 + $0x58] sm:$0xff]
    %v82 = vld [vmem:[#allocation6 + $0x60] sm:$0xff]
    %v83 = vld [vmem:[#allocation6 + $0x68] sm:$0xff]
    %v84 = vld [vmem:[#allocation6 + $0x70] sm:$0xff]
    %v85 = vld [vmem:[#allocation6 + $0x78] sm:$0xff]
    %v86 = vld [vmem:[#allocation9] sm:$0x1]
    %v87 = vlaneseq
    %v88 = vshrl.u32 %v87, 7
    %v89 = vsub.s32 0, %v88
    %v90 = vrot.slane %v86, %v89
    %91 = vmatprep.subr.mxu0 0.0
    %92 = vmatpush1.msra.mxu0 %v70
    %93 = vmatprep.subr.mxu0 0.0
    %94 = vmatpush1.msra.mxu0 %v71
    %95 = vmatprep.subr.mxu0 0.0
    %96 = vmatpush1.msra.mxu0 %v72
    %97 = vmatprep.subr.mxu0 0.0
    %98 = vmatpush1.msra.mxu0 %v73
    %99 = vmatprep.subr.mxu0 0.0
    %100 = vmatpush1.msra.mxu0 %v74
    %101 = vmatprep.subr.mxu0 0.0
    %102 = vmatpush1.msra.mxu0 %v75
    %103 = vmatprep.subr.mxu0 0.0
    %104 = vmatpush1.msra.mxu0 %v76
    %105 = vmatprep.subr.mxu0 0.0
    %106 = vmatpush1.msra.mxu0 %v77
    %107 = vmatprep.subr.mxu0 0.0
    %108 = vmatpush1.msra.mxu0 %v78
    %109 = vmatprep.subr.mxu0 0.0
    %110 = vmatpush1.msra.mxu0 %v79
    %111 = vmatprep.subr.mxu0 0.0
    %112 = vmatpush1.msra.mxu0 %v80
    %113 = vmatprep.subr.mxu0 0.0
    %114 = vmatpush1.msra.mxu0 %v81
    %115 = vmatprep.subr.mxu0 0.0
    %116 = vmatpush1.msra.mxu0 %v82
    %117 = vmatprep.subr.mxu0 0.0
    %118 = vmatpush1.msra.mxu0 %v83
    %119 = vmatprep.subr.mxu0 0.0
    %120 = vmatpush1.msra.mxu0 %v84
    %121 = vmatprep.subr.mxu0 0.0
    %122 = vmatpush1.msra.mxu0 %v85
    %123 = vmatprep.subr.mxu0 0.0
    %124 = vmatpush1.msra.mxu0 0.0
    %125 = vmatprep.subr.mxu0 0.0
    %126 = vmatpush1.msra.mxu0 0.0
    %127 = vmatprep.subr.mxu0 0.0
    %128 = vmatpush1.msra.mxu0 0.0
    %129 = vmatprep.subr.mxu0 0.0
    %130 = vmatpush1.msra.mxu0 0.0
    %131 = vmatprep.subr.mxu0 0.0
    %132 = vmatpush1.msra.mxu0 0.0
    %133 = vmatprep.subr.mxu0 0.0
    %134 = vmatpush1.msra.mxu0 0.0
    %135 = vmatprep.subr.mxu0 0.0
    %136 = vmatpush1.msra.mxu0 0.0
    %137 = vmatprep.subr.mxu0 0.0
    %138 = vmatpush1.msra.mxu0 0.0
    %139 = vmatprep.subr.mxu0 0.0
    %140 = vmatpush1.msra.mxu0 0.0
    %141 = vmatprep.subr.mxu0 0.0
    %142 = vmatpush1.msra.mxu0 0.0
    %143 = vmatprep.subr.mxu0 0.0
    %144 = vmatpush1.msra.mxu0 0.0
    %145 = vmatprep.subr.mxu0 0.0
    %146 = vmatpush1.msra.mxu0 0.0
    %147 = vmatprep.subr.mxu0 0.0
    %148 = vmatpush1.msra.mxu0 0.0
    %149 = vmatprep.subr.mxu0 0.0
    %150 = vmatpush1.msra.mxu0 0.0
    %151 = vmatprep.subr.mxu0 0.0
    %152 = vmatpush1.msra.mxu0 0.0
    %153 = vmatprep.subr.mxu0 0.0
    %154 = vmatpush1.msra.mxu0 0.0
    %155 = vmatprep.mubr.f32.mxu0 0.0
    %156 = vmatmul.mubr.f32.gmra.mrb[0].mxu0 %v69
    %v157 = vpop.f32.mrb[0].mxu0
    %v158 = vadd.f32 %v90, %v157
    %v159 = vpop.f32.mrb[0].mxu0
    %160 = vdwg.mxu0
    %v161 = vmax.f32 %v158, 0.0
    %162 = vst [vmem:[#allocation2] sm:$0xff] %v161
    %v163 = vld [vmem:[#allocation2] sm:$0xff]
    %v164 = vld [vmem:[#allocation6] sm:$0xff]
    %v165 = vld [vmem:[#allocation6 + $0x8] sm:$0xff]
    %v166 = vld [vmem:[#allocation6 + $0x10] sm:$0xff]
    %v167 = vld [vmem:[#allocation6 + $0x18] sm:$0xff]
    %v168 = vld [vmem:[#allocation6 + $0x20] sm:$0xff]
    %v169 = vld [vmem:[#allocation6 + $0x28] sm:$0xff]
    %v170 = vld [vmem:[#allocation6 + $0x30] sm:$0xff]
    %v171 = vld [vmem:[#allocation6 + $0x38] sm:$0xff]
    %v172 = vld [vmem:[#allocation6 + $0x40] sm:$0xff]
    %v173 = vld [vmem:[#allocation6 + $0x48] sm:$0xff]
    %v174 = vld [vmem:[#allocation6 + $0x50] sm:$0xff]
    %v175 = vld [vmem:[#allocation6 + $0x58] sm:$0xff]
    %v176 = vld [vmem:[#allocation6 + $0x60] sm:$0xff]
    %v177 = vld [vmem:[#allocation6 + $0x68] sm:$0xff]
    %v178 = vld [vmem:[#allocation6 + $0x70] sm:$0xff]
    %v179 = vld [vmem:[#allocation6 + $0x78] sm:$0xff]
    %v180 = vld [vmem:[#allocation9 + $0x1] sm:$0x1]
    %v181 = vlaneseq
    %v182 = vshrl.u32 %v181, 7
    %v183 = vsub.s32 0, %v182
    %v184 = vrot.slane %v180, %v183
    %185 = vmatprep.subr.mxu0 0.0
    %186 = vmatpush1.msra.mxu0 %v164
    %187 = vmatprep.subr.mxu0 0.0
    %188 = vmatpush1.msra.mxu0 %v165
    %189 = vmatprep.subr.mxu0 0.0
    %190 = vmatpush1.msra.mxu0 %v166
    %191 = vmatprep.subr.mxu0 0.0
    %192 = vmatpush1.msra.mxu0 %v167
    %193 = vmatprep.subr.mxu0 0.0
    %194 = vmatpush1.msra.mxu0 %v168
    %195 = vmatprep.subr.mxu0 0.0
    %196 = vmatpush1.msra.mxu0 %v169
    %197 = vmatprep.subr.mxu0 0.0
    %198 = vmatpush1.msra.mxu0 %v170
    %199 = vmatprep.subr.mxu0 0.0
    %200 = vmatpush1.msra.mxu0 %v171
    %201 = vmatprep.subr.mxu0 0.0
    %202 = vmatpush1.msra.mxu0 %v172
    %203 = vmatprep.subr.mxu0 0.0
    %204 = vmatpush1.msra.mxu0 %v173
    %205 = vmatprep.subr.mxu0 0.0
    %206 = vmatpush1.msra.mxu0 %v174
    %207 = vmatprep.subr.mxu0 0.0
    %208 = vmatpush1.msra.mxu0 %v175
    %209 = vmatprep.subr.mxu0 0.0
    %210 = vmatpush1.msra.mxu0 %v176
    %211 = vmatprep.subr.mxu0 0.0
    %212 = vmatpush1.msra.mxu0 %v177
    %213 = vmatprep.subr.mxu0 0.0
    %214 = vmatpush1.msra.mxu0 %v178
    %215 = vmatprep.subr.mxu0 0.0
    %216 = vmatpush1.msra.mxu0 %v179
    %217 = vmatprep.subr.mxu0 0.0
    %218 = vmatpush1.msra.mxu0 0.0
    %219 = vmatprep.subr.mxu0 0.0
    %220 = vmatpush1.msra.mxu0 0.0
    %221 = vmatprep.subr.mxu0 0.0
    %222 = vmatpush1.msra.mxu0 0.0
    %223 = vmatprep.subr.mxu0 0.0
    %224 = vmatpush1.msra.mxu0 0.0
    %225 = vmatprep.subr.mxu0 0.0
    %226 = vmatpush1.msra.mxu0 0.0
    %227 = vmatprep.subr.mxu0 0.0
    %228 = vmatpush1.msra.mxu0 0.0
    %229 = vmatprep.subr.mxu0 0.0
    %230 = vmatpush1.msra.mxu0 0.0
    %231 = vmatprep.subr.mxu0 0.0
    %232 = vmatpush1.msra.mxu0 0.0
    %233 = vmatprep.subr.mxu0 0.0
    %234 = vmatpush1.msra.mxu0 0.0
    %235 = vmatprep.subr.mxu0 0.0
    %236 = vmatpush1.msra.mxu0 0.0
    %237 = vmatprep.subr.mxu0 0.0
    %238 = vmatpush1.msra.mxu0 0.0
    %239 = vmatprep.subr.mxu0 0.0
    %240 = vmatpush1.msra.mxu0 0.0
    %241 = vmatprep.subr.mxu0 0.0
    %242 = vmatpush1.msra.mxu0 0.0
    %243 = vmatprep.subr.mxu0 0.0
    %244 = vmatpush1.msra.mxu0 0.0
    %245 = vmatprep.subr.mxu0 0.0
    %246 = vmatpush1.msra.mxu0 0.0
    %247 = vmatprep.subr.mxu0 0.0
    %248 = vmatpush1.msra.mxu0 0.0
    %249 = vmatprep.mubr.f32.mxu0 0.0
    %250 = vmatmul.mubr.f32.gmra.mrb[0].mxu0 %v163
    %v251 = vpop.f32.mrb[0].mxu0
    %v252 = vadd.f32 %v184, %v251
    %v253 = vpop.f32.mrb[0].mxu0
    %254 = vdwg.mxu0
    %v255 = vmax.f32 %v252, 0.0
    %256 = vst [vmem:[#allocation2] sm:$0xff] %v255
    %v257 = vld [vmem:[#allocation2] sm:$0xff]
    %v258 = vld [vmem:[#allocation8] sm:$0xff]
    %v259 = vld [vmem:[#allocation8 + $0x8] sm:$0xff]
    %v260 = vld [vmem:[#allocation8 + $0x10] sm:$0xff]
    %v261 = vld [vmem:[#allocation8 + $0x18] sm:$0xff]
    %v262 = vld [vmem:[#allocation8 + $0x20] sm:$0xff]
    %v263 = vld [vmem:[#allocation8 + $0x28] sm:$0xff]
    %v264 = vld [vmem:[#allocation8 + $0x30] sm:$0xff]
    %v265 = vld [vmem:[#allocation8 + $0x38] sm:$0xff]
    %v266 = vld [vmem:[#allocation8 + $0x40] sm:$0xff]
    %v267 = vld [vmem:[#allocation8 + $0x48] sm:$0xff]
    %v268 = vld [vmem:[#allocation8 + $0x50] sm:$0xff]
    %v269 = vld [vmem:[#allocation8 + $0x58] sm:$0xff]
    %v270 = vld [vmem:[#allocation8 + $0x60] sm:$0xff]
    %v271 = vld [vmem:[#allocation8 + $0x68] sm:$0xff]
    %v272 = vld [vmem:[#allocation8 + $0x70] sm:$0xff]
    %v273 = vld [vmem:[#allocation8 + $0x78] sm:$0xff]
    %v274 = vld [vmem:[#allocation9 + $0x3] sm:$0x1]
    %v275 = vlaneseq
    %v276 = vshrl.u32 %v275, 7
    %v277 = vsub.s32 0, %v276
    %v278 = vrot.slane %v274, %v277
    %279 = vmatprep.subr.mxu0 0.0
    %280 = vmatpush1.msra.mxu0 %v258
    %281 = vmatprep.subr.mxu0 0.0
    %282 = vmatpush1.msra.mxu0 %v259
    %283 = vmatprep.subr.mxu0 0.0
    %284 = vmatpush1.msra.mxu0 %v260
    %285 = vmatprep.subr.mxu0 0.0
    %286 = vmatpush1.msra.mxu0 %v261
    %287 = vmatprep.subr.mxu0 0.0
    %288 = vmatpush1.msra.mxu0 %v262
    %289 = vmatprep.subr.mxu0 0.0
    %290 = vmatpush1.msra.mxu0 %v263
    %291 = vmatprep.subr.mxu0 0.0
    %292 = vmatpush1.msra.mxu0 %v264
    %293 = vmatprep.subr.mxu0 0.0
    %294 = vmatpush1.msra.mxu0 %v265
    %295 = vmatprep.subr.mxu0 0.0
    %296 = vmatpush1.msra.mxu0 %v266
    %297 = vmatprep.subr.mxu0 0.0
    %298 = vmatpush1.msra.mxu0 %v267
    %299 = vmatprep.subr.mxu0 0.0
    %300 = vmatpush1.msra.mxu0 %v268
    %301 = vmatprep.subr.mxu0 0.0
    %302 = vmatpush1.msra.mxu0 %v269
    %303 = vmatprep.subr.mxu0 0.0
    %304 = vmatpush1.msra.mxu0 %v270
    %305 = vmatprep.subr.mxu0 0.0
    %306 = vmatpush1.msra.mxu0 %v271
    %307 = vmatprep.subr.mxu0 0.0
    %308 = vmatpush1.msra.mxu0 %v272
    %309 = vmatprep.subr.mxu0 0.0
    %310 = vmatpush1.msra.mxu0 %v273
    %311 = vmatprep.subr.mxu0 0.0
    %312 = vmatpush1.msra.mxu0 0.0
    %313 = vmatprep.subr.mxu0 0.0
    %314 = vmatpush1.msra.mxu0 0.0
    %315 = vmatprep.subr.mxu0 0.0
    %316 = vmatpush1.msra.mxu0 0.0
    %317 = vmatprep.subr.mxu0 0.0
    %318 = vmatpush1.msra.mxu0 0.0
    %319 = vmatprep.subr.mxu0 0.0
    %320 = vmatpush1.msra.mxu0 0.0
    %321 = vmatprep.subr.mxu0 0.0
    %322 = vmatpush1.msra.mxu0 0.0
    %323 = vmatprep.subr.mxu0 0.0
    %324 = vmatpush1.msra.mxu0 0.0
    %325 = vmatprep.subr.mxu0 0.0
    %326 = vmatpush1.msra.mxu0 0.0
    %327 = vmatprep.subr.mxu0 0.0
    %328 = vmatpush1.msra.mxu0 0.0
    %329 = vmatprep.subr.mxu0 0.0
    %330 = vmatpush1.msra.mxu0 0.0
    %331 = vmatprep.subr.mxu0 0.0
    %332 = vmatpush1.msra.mxu0 0.0
    %333 = vmatprep.subr.mxu0 0.0
    %334 = vmatpush1.msra.mxu0 0.0
    %335 = vmatprep.subr.mxu0 0.0
    %336 = vmatpush1.msra.mxu0 0.0
    %337 = vmatprep.subr.mxu0 0.0
    %338 = vmatpush1.msra.mxu0 0.0
    %339 = vmatprep.subr.mxu0 0.0
    %340 = vmatpush1.msra.mxu0 0.0
    %341 = vmatprep.subr.mxu0 0.0
    %342 = vmatpush1.msra.mxu0 0.0
    %343 = vmatprep.mubr.f32.mxu0 0.0
    %344 = vmatmul.mubr.f32.gmra.mrb[0].mxu0 %v257
    %v345 = vpop.f32.mrb[0].mxu0
    %v346 = vadd.f32 %v278, %v345
    %v347 = vpop.f32.mrb[0].mxu0
    %348 = vdwg.mxu0
    %v349 = vmax.f32 %v346, 0.0
    %350 = vst [vmem:[#allocation11] sm:$0xff] %v349
    // Predicated region
    $region34: #{tpu_custom_call.1} parent=1 // pred_check
      _
    $region35: #{tpu_custom_call.1} parent=1 // pred_check_branch
      %352 = sbr.rel (0) target = $region37
    $region36: #{tpu_custom_call.1} parent=1 // pred_region
      %s354 = ssub.s32 128, 128
      %355 = vsyncadd [#allocation5], %s354
      %s357 = sshll.u32 [#allocation11], 4
      %s358 = int_to_ptr.vmem [resolvable:$true] %s357
      %360 = dma.vmem_to_hbm [thread:$0]  %s358, 128, %s4, [#allocation5]
    $region37: #{tpu_custom_call.1} parent=1 // pred_fallthru
      _
    // Predicated region
    $region38: #{tpu_custom_call.1} parent=1 // pred_check
      _
    $region39: #{tpu_custom_call.1} parent=1 // pred_check_branch
      %362 = sbr.rel (0) target = $region41
    $region40: #{tpu_custom_call.1} parent=1 // pred_region
      %363 = dma.done [#allocation5], 128
    $region41: #{tpu_custom_call.1} parent=1 // pred_fallthru
      _
    %364 = vsyncpa [#allocation4], 1
    %365 = vsyncpa [#allocation7], 1
    %366 = vsyncpa [#allocation10], 1
    %367 = vsyncpa [#allocation5], 1

// kernel: tpu_custom_call.1
$region0: #{tpu_custom_call.1}
  #allocation0 [shape = 'u32[]', space=smem, size = 0x4, offset = 0x4, fixed_abs, tag = 'smem constant byte address 0x4 - core index']
  #allocation1 [shape = 'u32[144,128]{1,0:T(1,128)}', space=vmem, size = 0x12000, scoped, tag = 'internal scratch']
  #allocation2 [shape = 'f32[8,128]{1,0:T(8,128)}', space=vmem, size = 0x1000, scoped, tag = 'scratch operand']
  %s0 = inlined_call_operand.hbm [shape: f32[8,128], index: 0, kind: input, shape index: {}]
  %s1 = inlined_call_operand.hbm [shape: f32[128,128], index: 1, kind: input, shape index: {}]
  %s2 = inlined_call_operand.hbm [shape: f32[128,128], index: 2, kind: input, shape index: {}]
  %s3 = inlined_call_operand.hbm [shape: f32[8,128], index: 3, kind: input, shape index: {}]
  %s4 = inlined_call_operand.hbm [shape: f32[8,128], index: 4, kind: output, shape index: {}]
  %s5 = sld [smem:[#allocation0]]
  $region42: #{tpu_custom_call.1} parent=0
    _
  %s7 = ssub.s32 1, %s5
  %s8 = scalar_select 0, %s7, %s5
  $region1: #{tpu_custom_call.1} parent=0
    #allocation3 [shape = 'u8[4096]{0}', space=vmem, size = 0x1000, scoped, tag = 'input window, operand 0, single buffered']
    #allocation4 [shape = 's32[1]{0}', space=sflag, size = 0x4, scoped, tag = 'scoped memory for tpu_custom_call.1']
    #allocation5 [shape = 's32[1]{0}', space=sflag, size = 0x4, scoped, tag = 'scoped memory for tpu_custom_call.1']
    #allocation6 [shape = 'u8[65536]{0}', space=vmem, size = 0x10000, scoped, tag = 'input window, operand 1, single buffered']
    #allocation7 [shape = 's32[1]{0}', space=sflag, size = 0x4, scoped, tag = 'scoped memory for tpu_custom_call.1']
    #allocation8 [shape = 'u8[65536]{0}', space=vmem, size = 0x10000, scoped, tag = 'input window, operand 2, single buffered']
    #allocation9 [shape = 'u8[4096]{0}', space=vmem, size = 0x1000, scoped, tag = 'input window, operand 3, single buffered']
    #allocation10 [shape = 's32[1]{0}', space=sflag, size = 0x4, scoped, tag = 'scoped memory for tpu_custom_call.1']
    #allocation11 [shape = 'u8[4096]{0}', space=vmem, size = 0x1000, scoped, tag = 'output window, operand 0, single buffered']
    %9 = vsyncpa [#allocation4], 0
    %10 = vsyncpa [#allocation7], 0
    %11 = vsyncpa [#allocation10], 0
    %12 = vsyncpa [#allocation5], 0
    // Predicated region
    $region2: #{tpu_custom_call.1} parent=1 // pred_check
      _
    $region3: #{tpu_custom_call.1} parent=1 // pred_check_branch
      %14 = sbr.rel (0) target = $region5
    $region4: #{tpu_custom_call.1} parent=1 // pred_region
      %s16 = ssub.s32 128, 128
      %17 = vsyncadd [#allocation4], %s16
      %s19 = sshll.u32 [#allocation3], 4
      %s20 = int_to_ptr.vmem [resolvable:$true] %s19
      %22 = dma.hbm_to_vmem [thread:$0]  %s0, 128, %s20, [#allocation4]
    $region5: #{tpu_custom_call.1} parent=1 // pred_fallthru
      _
    // Predicated region
    $region6: #{tpu_custom_call.1} parent=1 // pred_check
      _
    $region7: #{tpu_custom_call.1} parent=1 // pred_check_branch
      %24 = sbr.rel (0) target = $region9
    $region8: #{tpu_custom_call.1} parent=1 // pred_region
      %s26 = ssub.s32 2048, 2048
      %27 = vsyncadd [#allocation7], %s26
      %s28 = sshll.u32 [#allocation6], 4
      %s29 = int_to_ptr.vmem [resolvable:$true] %s28
      %34 = dma.hbm_to_vmem [thread:$0]  %s1, 2048, %s29, [#allocation7], 128, 128, 8
    $region9: #{tpu_custom_call.1} parent=1 // pred_fallthru
      _
    // Predicated region
    $region10: #{tpu_custom_call.1} parent=1 // pred_check
      _
    $region11: #{tpu_custom_call.1} parent=1 // pred_check_branch
      %36 = sbr.rel (0) target = $region13
    $region12: #{tpu_custom_call.1} parent=1 // pred_region
      %s38 = ssub.s32 2048, 2048
      %39 = vsyncadd [#allocation7], %s38
      %s40 = sshll.u32 [#allocation8], 4
      %s41 = int_to_ptr.vmem [resolvable:$true] %s40
      %46 = dma.hbm_to_vmem [thread:$0]  %s2, 2048, %s41, [#allocation7], 128, 128, 8
    $region13: #{tpu_custom_call.1} parent=1 // pred_fallthru
      _
    // Predicated region
    $region14: #{tpu_custom_call.1} parent=1 // pred_check
      _
    $region15: #{tpu_custom_call.1} parent=1 // pred_check_branch
      %48 = sbr.rel (0) target = $region17
    $region16: #{tpu_custom_call.1} parent=1 // pred_region
      %s50 = ssub.s32 128, 128
      %51 = vsyncadd [#allocation10], %s50
      %s53 = sshll.u32 [#allocation9], 4
      %s54 = int_to_ptr.vmem [resolvable:$true] %s53
      %56 = dma.hbm_to_vmem [thread:$0]  %s3, 128, %s54, [#allocation10]
    $region17: #{tpu_custom_call.1} parent=1 // pred_fallthru
      _
    // Predicated region
    $region18: #{tpu_custom_call.1} parent=1 // pred_check
      _
    $region19: #{tpu_custom_call.1} parent=1 // pred_check_branch
      %58 = sbr.rel (0) target = $region21
    $region20: #{tpu_custom_call.1} parent=1 // pred_region
      %59 = dma.done [#allocation4], 128
    $region21: #{tpu_custom_call.1} parent=1 // pred_fallthru
      _
    // Predicated region
    $region22: #{tpu_custom_call.1} parent=1 // pred_check
      _
    $region23: #{tpu_custom_call.1} parent=1 // pred_check_branch
      %61 = sbr.rel (0) target = $region25
    $region24: #{tpu_custom_call.1} parent=1 // pred_region
      %62 = dma.done [#allocation7], 2048
    $region25: #{tpu_custom_call.1} parent=1 // pred_fallthru
      _
    // Predicated region
    $region26: #{tpu_custom_call.1} parent=1 // pred_check
      _
    $region27: #{tpu_custom_call.1} parent=1 // pred_check_branch
      %64 = sbr.rel (0) target = $region29
    $region28: #{tpu_custom_call.1} parent=1 // pred_region
      %65 = dma.done [#allocation7], 2048
    $region29: #{tpu_custom_call.1} parent=1 // pred_fallthru
      _
    // Predicated region
    $region30: #{tpu_custom_call.1} parent=1 // pred_check
      _
    $region31: #{tpu_custom_call.1} parent=1 // pred_check_branch
      %67 = sbr.rel (0) target = $region33
    $region32: #{tpu_custom_call.1} parent=1 // pred_region
      %68 = dma.done [#allocation10], 128
    $region33: #{tpu_custom_call.1} parent=1 // pred_fallthru
      _
    %v69 = vld [vmem:[#allocation3] sm:$0xff]
    %v70 = vld [vmem:[#allocation6] sm:$0xff]
    %v71 = vld [vmem:[#allocation6 + $0x8] sm:$0xff]
    %v72 = vld [vmem:[#allocation6 + $0x10] sm:$0xff]
    %v73 = vld [vmem:[#allocation6 + $0x18] sm:$0xff]
    %v74 = vld [vmem:[#allocation6 + $0x20] sm:$0xff]
    %v75 = vld [vmem:[#allocation6 + $0x28] sm:$0xff]
    %v76 = vld [vmem:[#allocation6 + $0x30] sm:$0xff]
    %v77 = vld [vmem:[#allocation6 + $0x38] sm:$0xff]
    %v78 = vld [vmem:[#allocation6 + $0x40] sm:$0xff]
    %v79 = vld [vmem:[#allocation6 + $0x48] sm:$0xff]
    %v80 = vld [vmem:[#allocation6 + $0x50] sm:$0xff]
    %v81 = vld [vmem:[#allocation6 + $0x58] sm:$0xff]
    %v82 = vld [vmem:[#allocation6 + $0x60] sm:$0xff]
    %v83 = vld [vmem:[#allocation6 + $0x68] sm:$0xff]
    %v84 = vld [vmem:[#allocation6 + $0x70] sm:$0xff]
    %v85 = vld [vmem:[#allocation6 + $0x78] sm:$0xff]
    %v86 = vld [vmem:[#allocation9] sm:$0x1]
    %v87 = vlaneseq
    %v88 = vshrl.u32 %v87, 7
    %v89 = vsub.s32 0, %v88
    %v90 = vrot.slane %v86, %v89
    %91 = vmatprep.subr.mxu0 0.0
    %92 = vmatpush1.msra.mxu0 %v70
    %93 = vmatprep.subr.mxu0 0.0
    %94 = vmatpush1.msra.mxu0 %v71
    %95 = vmatprep.subr.mxu0 0.0
    %96 = vmatpush1.msra.mxu0 %v72
    %97 = vmatprep.subr.mxu0 0.0
    %98 = vmatpush1.msra.mxu0 %v73
    %99 = vmatprep.subr.mxu0 0.0
    %100 = vmatpush1.msra.mxu0 %v74
    %101 = vmatprep.subr.mxu0 0.0
    %102 = vmatpush1.msra.mxu0 %v75
    %103 = vmatprep.subr.mxu0 0.0
    %104 = vmatpush1.msra.mxu0 %v76
    %105 = vmatprep.subr.mxu0 0.0
    %106 = vmatpush1.msra.mxu0 %v77
    %107 = vmatprep.subr.mxu0 0.0
    %108 = vmatpush1.msra.mxu0 %v78
    %109 = vmatprep.subr.mxu0 0.0
    %110 = vmatpush1.msra.mxu0 %v79
    %111 = vmatprep.subr.mxu0 0.0
    %112 = vmatpush1.msra.mxu0 %v80
    %113 = vmatprep.subr.mxu0 0.0
    %114 = vmatpush1.msra.mxu0 %v81
    %115 = vmatprep.subr.mxu0 0.0
    %116 = vmatpush1.msra.mxu0 %v82
    %117 = vmatprep.subr.mxu0 0.0
    %118 = vmatpush1.msra.mxu0 %v83
    %119 = vmatprep.subr.mxu0 0.0
    %120 = vmatpush1.msra.mxu0 %v84
    %121 = vmatprep.subr.mxu0 0.0
    %122 = vmatpush1.msra.mxu0 %v85
    %123 = vmatprep.subr.mxu0 0.0
    %124 = vmatpush1.msra.mxu0 0.0
    %125 = vmatprep.subr.mxu0 0.0
    %126 = vmatpush1.msra.mxu0 0.0
    %127 = vmatprep.subr.mxu0 0.0
    %128 = vmatpush1.msra.mxu0 0.0
    %129 = vmatprep.subr.mxu0 0.0
    %130 = vmatpush1.msra.mxu0 0.0
    %131 = vmatprep.subr.mxu0 0.0
    %132 = vmatpush1.msra.mxu0 0.0
    %133 = vmatprep.subr.mxu0 0.0
    %134 = vmatpush1.msra.mxu0 0.0
    %135 = vmatprep.subr.mxu0 0.0
    %136 = vmatpush1.msra.mxu0 0.0
    %137 = vmatprep.subr.mxu0 0.0
    %138 = vmatpush1.msra.mxu0 0.0
    %139 = vmatprep.subr.mxu0 0.0
    %140 = vmatpush1.msra.mxu0 0.0
    %141 = vmatprep.subr.mxu0 0.0
    %142 = vmatpush1.msra.mxu0 0.0
    %143 = vmatprep.subr.mxu0 0.0
    %144 = vmatpush1.msra.mxu0 0.0
    %145 = vmatprep.subr.mxu0 0.0
    %146 = vmatpush1.msra.mxu0 0.0
    %147 = vmatprep.subr.mxu0 0.0
    %148 = vmatpush1.msra.mxu0 0.0
    %149 = vmatprep.subr.mxu0 0.0
    %150 = vmatpush1.msra.mxu0 0.0
    %151 = vmatprep.subr.mxu0 0.0
    %152 = vmatpush1.msra.mxu0 0.0
    %153 = vmatprep.subr.mxu0 0.0
    %154 = vmatpush1.msra.mxu0 0.0
    %155 = vmatprep.mubr.f32.mxu0 0.0
    %156 = vmatmul.mubr.f32.gmra.mrb[0].mxu0 %v69
    %v157 = vpop.f32.mrb[0].mxu0
    %v158 = vadd.f32 %v90, %v157
    %v159 = vpop.f32.mrb[0].mxu0
    %160 = vdwg.mxu0
    %v161 = vmax.f32 %v158, 0.0
    %162 = vst [vmem:[#allocation2] sm:$0xff] %v161
    %v163 = vld [vmem:[#allocation2] sm:$0xff]
    %v164 = vld [vmem:[#allocation6] sm:$0xff]
    %v165 = vld [vmem:[#allocation6 + $0x8] sm:$0xff]
    %v166 = vld [vmem:[#allocation6 + $0x10] sm:$0xff]
    %v167 = vld [vmem:[#allocation6 + $0x18] sm:$0xff]
    %v168 = vld [vmem:[#allocation6 + $0x20] sm:$0xff]
    %v169 = vld [vmem:[#allocation6 + $0x28] sm:$0xff]
    %v170 = vld [vmem:[#allocation6 + $0x30] sm:$0xff]
    %v171 = vld [vmem:[#allocation6 + $0x38] sm:$0xff]
    %v172 = vld [vmem:[#allocation6 + $0x40] sm:$0xff]
    %v173 = vld [vmem:[#allocation6 + $0x48] sm:$0xff]
    %v174 = vld [vmem:[#allocation6 + $0x50] sm:$0xff]
    %v175 = vld [vmem:[#allocation6 + $0x58] sm:$0xff]
    %v176 = vld [vmem:[#allocation6 + $0x60] sm:$0xff]
    %v177 = vld [vmem:[#allocation6 + $0x68] sm:$0xff]
    %v178 = vld [vmem:[#allocation6 + $0x70] sm:$0xff]
    %v179 = vld [vmem:[#allocation6 + $0x78] sm:$0xff]
    %v180 = vld [vmem:[#allocation9 + $0x1] sm:$0x1]
    %v181 = vlaneseq
    %v182 = vshrl.u32 %v181, 7
    %v183 = vsub.s32 0, %v182
    %v184 = vrot.slane %v180, %v183
    %185 = vmatprep.subr.mxu0 0.0
    %186 = vmatpush1.msra.mxu0 %v164
    %187 = vmatprep.subr.mxu0 0.0
    %188 = vmatpush1.msra.mxu0 %v165
    %189 = vmatprep.subr.mxu0 0.0
    %190 = vmatpush1.msra.mxu0 %v166
    %191 = vmatprep.subr.mxu0 0.0
    %192 = vmatpush1.msra.mxu0 %v167
    %193 = vmatprep.subr.mxu0 0.0
    %194 = vmatpush1.msra.mxu0 %v168
    %195 = vmatprep.subr.mxu0 0.0
    %196 = vmatpush1.msra.mxu0 %v169
    %197 = vmatprep.subr.mxu0 0.0
    %198 = vmatpush1.msra.mxu0 %v170
    %199 = vmatprep.subr.mxu0 0.0
    %200 = vmatpush1.msra.mxu0 %v171
    %201 = vmatprep.subr.mxu0 0.0
    %202 = vmatpush1.msra.mxu0 %v172
    %203 = vmatprep.subr.mxu0 0.0
    %204 = vmatpush1.msra.mxu0 %v173
    %205 = vmatprep.subr.mxu0 0.0
    %206 = vmatpush1.msra.mxu0 %v174
    %207 = vmatprep.subr.mxu0 0.0
    %208 = vmatpush1.msra.mxu0 %v175
    %209 = vmatprep.subr.mxu0 0.0
    %210 = vmatpush1.msra.mxu0 %v176
    %211 = vmatprep.subr.mxu0 0.0
    %212 = vmatpush1.msra.mxu0 %v177
    %213 = vmatprep.subr.mxu0 0.0
    %214 = vmatpush1.msra.mxu0 %v178
    %215 = vmatprep.subr.mxu0 0.0
    %216 = vmatpush1.msra.mxu0 %v179
    %217 = vmatprep.subr.mxu0 0.0
    %218 = vmatpush1.msra.mxu0 0.0
    %219 = vmatprep.subr.mxu0 0.0
    %220 = vmatpush1.msra.mxu0 0.0
    %221 = vmatprep.subr.mxu0 0.0
    %222 = vmatpush1.msra.mxu0 0.0
    %223 = vmatprep.subr.mxu0 0.0
    %224 = vmatpush1.msra.mxu0 0.0
    %225 = vmatprep.subr.mxu0 0.0
    %226 = vmatpush1.msra.mxu0 0.0
    %227 = vmatprep.subr.mxu0 0.0
    %228 = vmatpush1.msra.mxu0 0.0
    %229 = vmatprep.subr.mxu0 0.0
    %230 = vmatpush1.msra.mxu0 0.0
    %231 = vmatprep.subr.mxu0 0.0
    %232 = vmatpush1.msra.mxu0 0.0
    %233 = vmatprep.subr.mxu0 0.0
    %234 = vmatpush1.msra.mxu0 0.0
    %235 = vmatprep.subr.mxu0 0.0
    %236 = vmatpush1.msra.mxu0 0.0
    %237 = vmatprep.subr.mxu0 0.0
    %238 = vmatpush1.msra.mxu0 0.0
    %239 = vmatprep.subr.mxu0 0.0
    %240 = vmatpush1.msra.mxu0 0.0
    %241 = vmatprep.subr.mxu0 0.0
    %242 = vmatpush1.msra.mxu0 0.0
    %243 = vmatprep.subr.mxu0 0.0
    %244 = vmatpush1.msra.mxu0 0.0
    %245 = vmatprep.subr.mxu0 0.0
    %246 = vmatpush1.msra.mxu0 0.0
    %247 = vmatprep.subr.mxu0 0.0
    %248 = vmatpush1.msra.mxu0 0.0
    %249 = vmatprep.mubr.f32.mxu0 0.0
    %250 = vmatmul.mubr.f32.gmra.mrb[0].mxu0 %v163
    %v251 = vpop.f32.mrb[0].mxu0
    %v252 = vadd.f32 %v184, %v251
    %v253 = vpop.f32.mrb[0].mxu0
    %254 = vdwg.mxu0
    %v255 = vmax.f32 %v252, 0.0
    %256 = vst [vmem:[#allocation2] sm:$0xff] %v255
    %v257 = vld [vmem:[#allocation2] sm:$0xff]
    %v258 = vld [vmem:[#allocation8] sm:$0xff]
    %v259 = vld [vmem:[#allocation8 + $0x8] sm:$0xff]
    %v260 = vld [vmem:[#allocation8 + $0x10] sm:$0xff]
    %v261 = vld [vmem:[#allocation8 + $0x18] sm:$0xff]
    %v262 = vld [vmem:[#allocation8 + $0x20] sm:$0xff]
    %v263 = vld [vmem:[#allocation8 + $0x28] sm:$0xff]
    %v264 = vld [vmem:[#allocation8 + $0x30] sm:$0xff]
    %v265 = vld [vmem:[#allocation8 + $0x38] sm:$0xff]
    %v266 = vld [vmem:[#allocation8 + $0x40] sm:$0xff]
    %v267 = vld [vmem:[#allocation8 + $0x48] sm:$0xff]
    %v268 = vld [vmem:[#allocation8 + $0x50] sm:$0xff]
    %v269 = vld [vmem:[#allocation8 + $0x58] sm:$0xff]
    %v270 = vld [vmem:[#allocation8 + $0x60] sm:$0xff]
    %v271 = vld [vmem:[#allocation8 + $0x68] sm:$0xff]
    %v272 = vld [vmem:[#allocation8 + $0x70] sm:$0xff]
    %v273 = vld [vmem:[#allocation8 + $0x78] sm:$0xff]
    %v274 = vld [vmem:[#allocation9 + $0x3] sm:$0x1]
    %v275 = vlaneseq
    %v276 = vshrl.u32 %v275, 7
    %v277 = vsub.s32 0, %v276
    %v278 = vrot.slane %v274, %v277
    %279 = vmatprep.subr.mxu0 0.0
    %280 = vmatpush1.msra.mxu0 %v258
    %281 = vmatprep.subr.mxu0 0.0
    %282 = vmatpush1.msra.mxu0 %v259
    %283 = vmatprep.subr.mxu0 0.0
    %284 = vmatpush1.msra.mxu0 %v260
    %285 = vmatprep.subr.mxu0 0.0
    %286 = vmatpush1.msra.mxu0 %v261
    %287 = vmatprep.subr.mxu0 0.0
    %288 = vmatpush1.msra.mxu0 %v262
    %289 = vmatprep.subr.mxu0 0.0
    %290 = vmatpush1.msra.mxu0 %v263
    %291 = vmatprep.subr.mxu0 0.0
    %292 = vmatpush1.msra.mxu0 %v264
    %293 = vmatprep.subr.mxu0 0.0
    %294 = vmatpush1.msra.mxu0 %v265
    %295 = vmatprep.subr.mxu0 0.0
    %296 = vmatpush1.msra.mxu0 %v266
    %297 = vmatprep.subr.mxu0 0.0
    %298 = vmatpush1.msra.mxu0 %v267
    %299 = vmatprep.subr.mxu0 0.0
    %300 = vmatpush1.msra.mxu0 %v268
    %301 = vmatprep.subr.mxu0 0.0
    %302 = vmatpush1.msra.mxu0 %v269
    %303 = vmatprep.subr.mxu0 0.0
    %304 = vmatpush1.msra.mxu0 %v270
    %305 = vmatprep.subr.mxu0 0.0
    %306 = vmatpush1.msra.mxu0 %v271
    %307 = vmatprep.subr.mxu0 0.0
    %308 = vmatpush1.msra.mxu0 %v272
    %309 = vmatprep.subr.mxu0 0.0
    %310 = vmatpush1.msra.mxu0 %v273
    %311 = vmatprep.subr.mxu0 0.0
    %312 = vmatpush1.msra.mxu0 0.0
    %313 = vmatprep.subr.mxu0 0.0
    %314 = vmatpush1.msra.mxu0 0.0
    %315 = vmatprep.subr.mxu0 0.0
    %316 = vmatpush1.msra.mxu0 0.0
    %317 = vmatprep.subr.mxu0 0.0
    %318 = vmatpush1.msra.mxu0 0.0
    %319 = vmatprep.subr.mxu0 0.0
    %320 = vmatpush1.msra.mxu0 0.0
    %321 = vmatprep.subr.mxu0 0.0
    %322 = vmatpush1.msra.mxu0 0.0
    %323 = vmatprep.subr.mxu0 0.0
    %324 = vmatpush1.msra.mxu0 0.0
    %325 = vmatprep.subr.mxu0 0.0
    %326 = vmatpush1.msra.mxu0 0.0
    %327 = vmatprep.subr.mxu0 0.0
    %328 = vmatpush1.msra.mxu0 0.0
    %329 = vmatprep.subr.mxu0 0.0
    %330 = vmatpush1.msra.mxu0 0.0
    %331 = vmatprep.subr.mxu0 0.0
    %332 = vmatpush1.msra.mxu0 0.0
    %333 = vmatprep.subr.mxu0 0.0
    %334 = vmatpush1.msra.mxu0 0.0
    %335 = vmatprep.subr.mxu0 0.0
    %336 = vmatpush1.msra.mxu0 0.0
    %337 = vmatprep.subr.mxu0 0.0
    %338 = vmatpush1.msra.mxu0 0.0
    %339 = vmatprep.subr.mxu0 0.0
    %340 = vmatpush1.msra.mxu0 0.0
    %341 = vmatprep.subr.mxu0 0.0
    %342 = vmatpush1.msra.mxu0 0.0
    %343 = vmatprep.mubr.f32.mxu0 0.0
    %344 = vmatmul.mubr.f32.gmra.mrb[0].mxu0 %v257
    %v345 = vpop.f32.mrb[0].mxu0
    %v346 = vadd.f32 %v278, %v345
    %v347 = vpop.f32.mrb[0].mxu0
    %348 = vdwg.mxu0
    %v349 = vmax.f32 %v346, 0.0
    %350 = vst [vmem:[#allocation11] sm:$0xff] %v349
    // Predicated region
    $region34: #{tpu_custom_call.1} parent=1 // pred_check
      _
    $region35: #{tpu_custom_call.1} parent=1 // pred_check_branch
      %352 = sbr.rel (0) target = $region37
    $region36: #{tpu_custom_call.1} parent=1 // pred_region
      %s354 = ssub.s32 128, 128
      %355 = vsyncadd [#allocation5], %s354
      %s357 = sshll.u32 [#allocation11], 4
      %s358 = int_to_ptr.vmem [resolvable:$true] %s357
      %360 = dma.vmem_to_hbm [thread:$0]  %s358, 128, %s4, [#allocation5]
    $region37: #{tpu_custom_call.1} parent=1 // pred_fallthru
      _
    // Predicated region
    $region38: #{tpu_custom_call.1} parent=1 // pred_check
      _
    $region39: #{tpu_custom_call.1} parent=1 // pred_check_branch
      %362 = sbr.rel (0) target = $region41
    $region40: #{tpu_custom_call.1} parent=1 // pred_region
      %363 = dma.done [#allocation5], 128
    $region41: #{tpu_custom_call.1} parent=1 // pred_fallthru
      _
    %364 = vsyncpa [#allocation4], 1
    %365 = vsyncpa [#allocation7], 1
    %366 = vsyncpa [#allocation10], 1
    %367 = vsyncpa [#allocation5], 1

// kernel: tpu_custom_call.1
$region0: #{tpu_custom_call.1}
  #allocation0 [shape = 'u32[]', space=smem, size = 0x4, offset = 0x4, fixed_abs, tag = 'smem constant byte address 0x4 - core index']
  #allocation1 [shape = 'u32[144,128]{1,0:T(1,128)}', space=vmem, size = 0x12000, scoped, tag = 'internal scratch']
  #allocation2 [shape = 'f32[8,128]{1,0:T(8,128)}', space=vmem, size = 0x1000, scoped, tag = 'scratch operand']
  %s0 = inlined_call_operand.hbm [shape: f32[8,128], index: 0, kind: input, shape index: {}]
  %s1 = inlined_call_operand.hbm [shape: f32[128,128], index: 1, kind: input, shape index: {}]
  %s2 = inlined_call_operand.hbm [shape: f32[8,128], index: 2, kind: input, shape index: {}]
  %s3 = inlined_call_operand.hbm [shape: f32[8,128], index: 3, kind: output, shape index: {}]
  %s4 = sld [smem:[#allocation0]]
  $region42: #{tpu_custom_call.1} parent=0
    _
  %s6 = ssub.s32 1, %s4
  %s7 = scalar_select 0, %s6, %s4
  $region1: #{tpu_custom_call.1} parent=0
    #allocation3 [shape = 'u8[4096]{0}', space=vmem, size = 0x1000, scoped, tag = 'input window, operand 0, single buffered']
    #allocation4 [shape = 's32[1]{0}', space=sflag, size = 0x4, scoped, tag = 'scoped memory for tpu_custom_call.1']
    #allocation5 [shape = 's32[1]{0}', space=sflag, size = 0x4, scoped, tag = 'scoped memory for tpu_custom_call.1']
    #allocation6 [shape = 'u8[65536]{0}', space=vmem, size = 0x10000, scoped, tag = 'input window, operand 1, single buffered']
    #allocation7 [shape = 's32[1]{0}', space=sflag, size = 0x4, scoped, tag = 'scoped memory for tpu_custom_call.1']
    #allocation8 [shape = 'u8[4096]{0}', space=vmem, size = 0x1000, scoped, tag = 'input window, operand 2, single buffered']
    #allocation9 [shape = 'u8[4096]{0}', space=vmem, size = 0x1000, scoped, tag = 'output window, operand 0, single buffered']
    %8 = vsyncpa [#allocation4], 0
    %9 = vsyncpa [#allocation7], 0
    %10 = vsyncpa [#allocation5], 0
    // Predicated region
    $region2: #{tpu_custom_call.1} parent=1 // pred_check
      _
    $region3: #{tpu_custom_call.1} parent=1 // pred_check_branch
      %12 = sbr.rel (0) target = $region5
    $region4: #{tpu_custom_call.1} parent=1 // pred_region
      %s14 = ssub.s32 128, 128
      %15 = vsyncadd [#allocation4], %s14
      %s17 = sshll.u32 [#allocation3], 4
      %s18 = int_to_ptr.vmem [resolvable:$true] %s17
      %20 = dma.hbm_to_vmem [thread:$0]  %s0, 128, %s18, [#allocation4]
    $region5: #{tpu_custom_call.1} parent=1 // pred_fallthru
      _
    // Predicated region
    $region6: #{tpu_custom_call.1} parent=1 // pred_check
      _
    $region7: #{tpu_custom_call.1} parent=1 // pred_check_branch
      %22 = sbr.rel (0) target = $region9
    $region8: #{tpu_custom_call.1} parent=1 // pred_region
      %s24 = ssub.s32 2048, 2048
      %25 = vsyncadd [#allocation7], %s24
      %s26 = sshll.u32 [#allocation6], 4
      %s27 = int_to_ptr.vmem [resolvable:$true] %s26
      %32 = dma.hbm_to_vmem [thread:$0]  %s1, 2048, %s27, [#allocation7], 128, 128, 8
    $region9: #{tpu_custom_call.1} parent=1 // pred_fallthru
      _
    // Predicated region
    $region10: #{tpu_custom_call.1} parent=1 // pred_check
      _
    $region11: #{tpu_custom_call.1} parent=1 // pred_check_branch
      %34 = sbr.rel (0) target = $region13
    $region12: #{tpu_custom_call.1} parent=1 // pred_region
      %s36 = ssub.s32 128, 128
      %37 = vsyncadd [#allocation7], %s36
      %s39 = sshll.u32 [#allocation8], 4
      %s40 = int_to_ptr.vmem [resolvable:$true] %s39
      %42 = dma.hbm_to_vmem [thread:$0]  %s2, 128, %s40, [#allocation7]
    $region13: #{tpu_custom_call.1} parent=1 // pred_fallthru
      _
    // Predicated region
    $region14: #{tpu_custom_call.1} parent=1 // pred_check
      _
    $region15: #{tpu_custom_call.1} parent=1 // pred_check_branch
      %44 = sbr.rel (0) target = $region17
    $region16: #{tpu_custom_call.1} parent=1 // pred_region
      %45 = dma.done [#allocation4], 128
    $region17: #{tpu_custom_call.1} parent=1 // pred_fallthru
      _
    // Predicated region
    $region18: #{tpu_custom_call.1} parent=1 // pred_check
      _
    $region19: #{tpu_custom_call.1} parent=1 // pred_check_branch
      %47 = sbr.rel (0) target = $region21
    $region20: #{tpu_custom_call.1} parent=1 // pred_region
      %48 = dma.done [#allocation7], 2048
    $region21: #{tpu_custom_call.1} parent=1 // pred_fallthru
      _
    // Predicated region
    $region22: #{tpu_custom_call.1} parent=1 // pred_check
      _
    $region23: #{tpu_custom_call.1} parent=1 // pred_check_branch
      %50 = sbr.rel (0) target = $region25
    $region24: #{tpu_custom_call.1} parent=1 // pred_region
      %51 = dma.done [#allocation7], 128
    $region25: #{tpu_custom_call.1} parent=1 // pred_fallthru
      _
    %p52 = scmp.eq.s32.totalorder 0, 0
    // Predicated region
    $region26: #{tpu_custom_call.1} parent=1 // pred_check
      %p53 = pneg %p52
    $region27: #{tpu_custom_call.1} parent=1 // pred_check_branch
      %55 = sbr.rel (%p53) target = $region29
    $region28: #{tpu_custom_call.1} parent=1 // pred_region
      %56 = vst [vmem:[#allocation2] sm:$0xff] 0.0
    $region29: #{tpu_custom_call.1} parent=1 // pred_fallthru
      _
    %v57 = vld [vmem:[#allocation2] sm:$0xff]
    %v58 = vld [vmem:[#allocation3] sm:$0xff]
    %v59 = vld [vmem:[#allocation6] sm:$0xff]
    %v60 = vld [vmem:[#allocation6 + $0x8] sm:$0xff]
    %v61 = vld [vmem:[#allocation6 + $0x10] sm:$0xff]
    %v62 = vld [vmem:[#allocation6 + $0x18] sm:$0xff]
    %v63 = vld [vmem:[#allocation6 + $0x20] sm:$0xff]
    %v64 = vld [vmem:[#allocation6 + $0x28] sm:$0xff]
    %v65 = vld [vmem:[#allocation6 + $0x30] sm:$0xff]
    %v66 = vld [vmem:[#allocation6 + $0x38] sm:$0xff]
    %v67 = vld [vmem:[#allocation6 + $0x40] sm:$0xff]
    %v68 = vld [vmem:[#allocation6 + $0x48] sm:$0xff]
    %v69 = vld [vmem:[#allocation6 + $0x50] sm:$0xff]
    %v70 = vld [vmem:[#allocation6 + $0x58] sm:$0xff]
    %v71 = vld [vmem:[#allocation6 + $0x60] sm:$0xff]
    %v72 = vld [vmem:[#allocation6 + $0x68] sm:$0xff]
    %v73 = vld [vmem:[#allocation6 + $0x70] sm:$0xff]
    %v74 = vld [vmem:[#allocation6 + $0x78] sm:$0xff]
    %75 = vmatprep.subr.mxu0 0.0
    %76 = vmatpush1.msra.mxu0 %v59
    %77 = vmatprep.subr.mxu0 0.0
    %78 = vmatpush1.msra.mxu0 %v60
    %79 = vmatprep.subr.mxu0 0.0
    %80 = vmatpush1.msra.mxu0 %v61
    %81 = vmatprep.subr.mxu0 0.0
    %82 = vmatpush1.msra.mxu0 %v62
    %83 = vmatprep.subr.mxu0 0.0
    %84 = vmatpush1.msra.mxu0 %v63
    %85 = vmatprep.subr.mxu0 0.0
    %86 = vmatpush1.msra.mxu0 %v64
    %87 = vmatprep.subr.mxu0 0.0
    %88 = vmatpush1.msra.mxu0 %v65
    %89 = vmatprep.subr.mxu0 0.0
    %90 = vmatpush1.msra.mxu0 %v66
    %91 = vmatprep.subr.mxu0 0.0
    %92 = vmatpush1.msra.mxu0 %v67
    %93 = vmatprep.subr.mxu0 0.0
    %94 = vmatpush1.msra.mxu0 %v68
    %95 = vmatprep.subr.mxu0 0.0
    %96 = vmatpush1.msra.mxu0 %v69
    %97 = vmatprep.subr.mxu0 0.0
    %98 = vmatpush1.msra.mxu0 %v70
    %99 = vmatprep.subr.mxu0 0.0
    %100 = vmatpush1.msra.mxu0 %v71
    %101 = vmatprep.subr.mxu0 0.0
    %102 = vmatpush1.msra.mxu0 %v72
    %103 = vmatprep.subr.mxu0 0.0
    %104 = vmatpush1.msra.mxu0 %v73
    %105 = vmatprep.subr.mxu0 0.0
    %106 = vmatpush1.msra.mxu0 %v74
    %107 = vmatprep.subr.mxu0 0.0
    %108 = vmatpush1.msra.mxu0 0.0
    %109 = vmatprep.subr.mxu0 0.0
    %110 = vmatpush1.msra.mxu0 0.0
    %111 = vmatprep.subr.mxu0 0.0
    %112 = vmatpush1.msra.mxu0 0.0
    %113 = vmatprep.subr.mxu0 0.0
    %114 = vmatpush1.msra.mxu0 0.0
    %115 = vmatprep.subr.mxu0 0.0
    %116 = vmatpush1.msra.mxu0 0.0
    %117 = vmatprep.subr.mxu0 0.0
    %118 = vmatpush1.msra.mxu0 0.0
    %119 = vmatprep.subr.mxu0 0.0
    %120 = vmatpush1.msra.mxu0 0.0
    %121 = vmatprep.subr.mxu0 0.0
    %122 = vmatpush1.msra.mxu0 0.0
    %123 = vmatprep.subr.mxu0 0.0
    %124 = vmatpush1.msra.mxu0 0.0
    %125 = vmatprep.subr.mxu0 0.0
    %126 = vmatpush1.msra.mxu0 0.0
    %127 = vmatprep.subr.mxu0 0.0
    %128 = vmatpush1.msra.mxu0 0.0
    %129 = vmatprep.subr.mxu0 0.0
    %130 = vmatpush1.msra.mxu0 0.0
    %131 = vmatprep.subr.mxu0 0.0
    %132 = vmatpush1.msra.mxu0 0.0
    %133 = vmatprep.subr.mxu0 0.0
    %134 = vmatpush1.msra.mxu0 0.0
    %135 = vmatprep.subr.mxu0 0.0
    %136 = vmatpush1.msra.mxu0 0.0
    %137 = vmatprep.subr.mxu0 0.0
    %138 = vmatpush1.msra.mxu0 0.0
    %139 = vmatprep.mubr.f32.mxu0 0.0
    %140 = vmatmul.mubr.f32.gmra.mrb[0].mxu0 %v58
    %v141 = vpop.f32.mrb[0].mxu0
    %v142 = vadd.f32 0.0, %v141
    %v143 = vpop.f32.mrb[0].mxu0
    %144 = vdwg.mxu0
    %v145 = vadd.f32 %v57, %v142
    %146 = vst [vmem:[#allocation2] sm:$0xff] %v145
    // Predicated region
    $region30: #{tpu_custom_call.1} parent=1 // pred_check
      %p147 = pneg %p52
    $region31: #{tpu_custom_call.1} parent=1 // pred_check_branch
      %149 = sbr.rel (%p147) target = $region33
    $region32: #{tpu_custom_call.1} parent=1 // pred_region
      %v150 = vld [vmem:[#allocation2] sm:$0xff]
      %v151 = vld [vmem:[#allocation8] sm:$0x1]
      %v152 = vlaneseq
      %v153 = vshrl.u32 %v152, 7
      %v154 = vsub.s32 0, %v153
      %v155 = vrot.slane %v151, %v154
      %v156 = vadd.f32 %v150, %v155
      %v157 = vmax.f32 %v156, 0.0
      %158 = vst [vmem:[#allocation9] sm:$0xff] %v157
    $region33: #{tpu_custom_call.1} parent=1 // pred_fallthru
      _
    // Predicated region
    $region34: #{tpu_custom_call.1} parent=1 // pred_check
      _
    $region35: #{tpu_custom_call.1} parent=1 // pred_check_branch
      %160 = sbr.rel (0) target = $region37
    $region36: #{tpu_custom_call.1} parent=1 // pred_region
      %s162 = ssub.s32 128, 128
      %163 = vsyncadd [#allocation5], %s162
      %s165 = sshll.u32 [#allocation9], 4
      %s166 = int_to_ptr.vmem [resolvable:$true] %s165
      %168 = dma.vmem_to_hbm [thread:$0]  %s166, 128, %s3, [#allocation5]
    $region37: #{tpu_custom_call.1} parent=1 // pred_fallthru
      _
    // Predicated region
    $region38: #{tpu_custom_call.1} parent=1 // pred_check
      _
    $region39: #{tpu_custom_call.1} parent=1 // pred_check_branch
      %170 = sbr.rel (0) target = $region41
    $region40: #{tpu_custom_call.1} parent=1 // pred_region
      %171 = dma.done [#allocation5], 128
    $region41: #{tpu_custom_call.1} parent=1 // pred_fallthru
      _
    %172 = vsyncpa [#allocation4], 1
    %173 = vsyncpa [#allocation7], 1
    %174 = vsyncpa [#allocation5], 1

</llo_original>
